<compile_context>
chip_gen: v6e
topology: v6e:2x2x1
jax: 0.10.0
libtpu: 0.0.40
codegen_flags: <defaults>
</compile_context>

<pallas_src>
import functools

import jax
import jax.numpy as jnp
from jax.experimental import pallas as pl
from jax.experimental.pallas import tpu as pltpu


def _trip(v):
    return (v, v, v) if isinstance(v, int) else tuple(v)


def _out_size(sz, k, s, p):
    return (sz + 2 * p - k) // s + 1


def _fused_conv_pool_bn_relu_kernel(
        a_ref, w_ref, scale_ref, shift_ref, o_ref, *,
        conv_out, pool_k, pool_s, pool_p, pool_out, neg_slope):
    """One grid step = one batch element: im2col GEMM -> MaxPool3d -> BN -> LeakyReLU."""
    Do, Ho, Wo = conv_out
    qD, qH, qW = pool_k
    tD, tH, tW = pool_s
    rD, rH, rW = pool_p
    Dp, Hp, Wp = pool_out
    HW = Ho * Wo

    w = w_ref[...]                                      # (Kpad, Cout) bf16, loaded once

    rows = []
    for dp in range(Dp):                                # pooled-depth planes, unrolled
        d_lo = max(0, dp * tD - rD)
        d_hi = min(Do, dp * tD - rD + qD)
        span = d_hi - d_lo

        # One fused-K MXU matmul per depth-pool window:
        #   (span*Ho*Wo, Kpad) @ (Kpad, Cout) -> f32    (128 x 128 x 8 for the test config)
        a_win = a_ref[d_lo * HW:d_hi * HW, :]
        conv = jnp.dot(a_win, w, preferred_element_type=jnp.float32)   # (span*HW, Cout)

        # MaxPool3d over depth inside the window (sublane-tile-aligned plane slices;
        # out-of-range taps are simply skipped, i.e. behave like the -inf padding).
        dpl = conv[0:HW]
        for j in range(1, span):
            dpl = jnp.maximum(dpl, conv[j * HW:(j + 1) * HW])          # (HW, Cout)

        # MaxPool3d over H (contiguous Wo-row blocks).
        hplanes = []
        for hp in range(Hp):
            h_lo = max(0, hp * tH - rH)
            h_hi = min(Ho, hp * tH - rH + qH)
            acc = dpl[h_lo * Wo:(h_lo + 1) * Wo]
            for h in range(h_lo + 1, h_hi):
                acc = jnp.maximum(acc, dpl[h * Wo:(h + 1) * Wo])
            hplanes.append(acc)                                        # (Wo, Cout)

        # MaxPool3d over W + lane-dense flatten in (hp, wp, c) order.
        pieces = []
        for hp in range(Hp):
            hpl = hplanes[hp]
            for wp in range(Wp):
                w_lo = max(0, wp * tW - rW)
                w_hi = min(Wo, wp * tW - rW + qW)
                best = hpl[w_lo:w_lo + 1, :]
                for ww in range(w_lo + 1, w_hi):
                    best = jnp.maximum(best, hpl[ww:ww + 1, :])
                pieces.append(best)                                    # (1, Cout)
        rows.append(jnp.concatenate(pieces, axis=-1))                  # (1, Hp*Wp*Cout)

    pooled = jnp.concatenate(rows, axis=0)                             # (Dp, Hp*Wp*Cout)

    # BatchNorm3d (inference affine, pre-tiled per lane) + LeakyReLU, all f32.
    # Dropout is identity in eval mode.
    y = pooled * scale_ref[...] + shift_ref[...]
    y = jnp.where(y >= 0.0, y, neg_slope * y)
    o_ref[...] = y.astype(o_ref.dtype)


def conv_layer_forward(x_ncdhw, weight, gamma, beta, running_mean, running_var,
                       *, kernel, pooling, relu_type="leaky", eps=1e-5):
    kD, kH, kW = _trip(kernel[0])
    sD, sH, sW = _trip(kernel[1])
    pD, pH, pW = _trip(kernel[2])
    qD, qH, qW = _trip(pooling[0])
    tD, tH, tW = _trip(pooling[1])
    rD, rH, rW = _trip(pooling[2])

    # PyTorch MaxPool3d requires padding <= kernel_size // 2, which also guarantees every
    # pool window contains at least one valid element (no all-(-inf) windows).
    assert rD <= qD // 2 and rH <= qH // 2 and rW <= qW // 2

    N, Cin, D, H, W = x_ncdhw.shape
    Cout = weight.shape[0]

    Do = _out_size(D, kD, sD, pD)
    Ho = _out_size(H, kH, sH, pH)
    Wo = _out_size(W, kW, sW, pW)
    Dp = _out_size(Do, qD, tD, rD)
    Hp = _out_size(Ho, qH, tH, rH)
    Wp = _out_size(Wo, qW, tW, rW)

    K = kD * kH * kW * Cin
    Kpad = ((K + 127) // 128) * 128          # fused contraction, zero-padded to full lanes
    M = Do * Ho * Wo
    Lout = Hp * Wp * Cout                    # lane-dense output row (= 128 for test config)

    # ---- wrapper-side (HBM) im2col, bf16, K padded to Kpad --------------------------------
    # Break-even favors HBM im2col whenever K <= ~128 (here 108): the kernel then runs a
    # clean (M, 128) @ (128, Cout) pipeline with zero in-kernel relayout.
    x = jnp.transpose(x_ncdhw, (0, 2, 3, 4, 1))                        # NDHWC
    xp = jnp.pad(x, ((0, 0), (pD, pD), (pH, pH), (pW, pW), (0, 0)))
    taps = []
    for kd in range(kD):
        for kh in range(kH):
            for kw in range(kW):
                taps.append(xp[:,
                               kd: kd + (Do - 1) * sD + 1: sD,
                               kh: kh + (Ho - 1) * sH + 1: sH,
                               kw: kw + (Wo - 1) * sW + 1: sW, :])     # (N, Do, Ho, Wo, Cin)
    a = jnp.concatenate(taps, axis=-1).reshape(N, M, K).astype(jnp.bfloat16)
    a = jnp.pad(a, ((0, 0), (0, 0), (0, Kpad - K)))                    # (N, M, Kpad)

    # weight (Cout, Cin, kD, kH, kW) -> (Kpad, Cout) with the same (tap-major, cin-minor) order.
    w2d = jnp.transpose(weight, (2, 3, 4, 1, 0)).reshape(K, Cout).astype(jnp.bfloat16)
    w2d = jnp.pad(w2d, ((0, Kpad - K), (0, 0)))

    # BatchNorm3d inference scale/shift (f32), pre-tiled to the kernel's (hp, wp, c) lane order.
    inv = 1.0 / jnp.sqrt(running_var.astype(jnp.float32) + eps)
    scale_c = (gamma.astype(jnp.float32) * inv).reshape(1, Cout)
    shift_c = (beta.astype(jnp.float32)
               - running_mean.astype(jnp.float32) * gamma.astype(jnp.float32) * inv
               ).reshape(1, Cout)
    scale = jnp.tile(scale_c, (1, Hp * Wp))                            # (1, Lout)
    shift = jnp.tile(shift_c, (1, Hp * Wp))                            # (1, Lout)

    neg_slope = 0.01 if relu_type == "leaky" else 0.0

    kernel_fn = functools.partial(
        _fused_conv_pool_bn_relu_kernel,
        conv_out=(Do, Ho, Wo),
        pool_k=(qD, qH, qW), pool_s=(tD, tH, tW), pool_p=(rD, rH, rW),
        pool_out=(Dp, Hp, Wp), neg_slope=neg_slope)

    # VMEM budget from the actual block sizes (double-buffered pipeline + headroom), capped
    # at 32 MiB so the same value is safe on v7x (64 MiB VMEM) and v5e/v6e (128 MiB).
    block_bytes = (M * Kpad * 2) + (Kpad * Cout * 2) + 2 * (Lout * 4) + (Dp * Lout * 4)
    vmem_limit = int(min(32 * 1024 * 1024, max(8 * 1024 * 1024, 4 * block_bytes)))

    out = pl.pallas_call(
        kernel_fn,
        out_shape=jax.ShapeDtypeStruct((N, Dp, Lout), jnp.float32),
        grid=(N,),
        in_specs=[
            pl.BlockSpec((None, M, Kpad), lambda n: (n, 0, 0)),    # per-batch im2col block
            pl.BlockSpec((Kpad, Cout), lambda n: (0, 0)),          # weight (constant)
            pl.BlockSpec((1, Lout), lambda n: (0, 0)),             # BN scale (constant)
            pl.BlockSpec((1, Lout), lambda n: (0, 0)),             # BN shift (constant)
        ],
        out_specs=pl.BlockSpec((None, Dp, Lout), lambda n: (n, 0, 0)),
        compiler_params=pltpu.CompilerParams(
            dimension_semantics=("parallel",),
            vmem_limit_bytes=vmem_limit),
    )(a, w2d, scale, shift)

    out = out.reshape(N, Dp, Hp, Wp, Cout)
    return jnp.transpose(out, (0, 4, 1, 2, 3))                        # (N, Cout, Dp, Hp, Wp)


def _reference(x, weight, gamma, beta, rm, rv, kernel, pooling, relu_type="leaky", eps=1e-5):
    ks, st, pd = kernel
    pk, pst, ppd = pooling
    # Mirror the kernel's bf16 MXU operands (f32 accumulation on both sides) so the check
    # isolates implementation correctness from the intended bf16 quantization.
    xq = x.astype(jnp.bfloat16).astype(jnp.float32)
    wq = weight.astype(jnp.bfloat16).astype(jnp.float32)
    y = jax.lax.conv_general_dilated(
        xq, wq, window_strides=(st,) * 3, padding=[(pd, pd)] * 3,
        dimension_numbers=("NCDHW", "OIDHW", "NCDHW"),
        precision=jax.lax.Precision.HIGHEST)
    y = jax.lax.reduce_window(
        y, -jnp.inf, jax.lax.max,
        window_dimensions=(1, 1, pk, pk, pk),
        window_strides=(1, 1, pst, pst, pst),
        padding=[(0, 0), (0, 0)] + [(ppd, ppd)] * 3)
    scale = gamma / jnp.sqrt(rv + eps)
    shift = beta - rm * scale
    y = y * scale[None, :, None, None, None] + shift[None, :, None, None, None]
    slope = 0.01 if relu_type == "leaky" else 0.0
    return jnp.where(y >= 0, y, slope * y)


if __name__ == "__main__":
    key = jax.random.PRNGKey(0)
    k_x, k_w, k_g, k_b, k_m, k_v = jax.random.split(key, 6)

    # ConvLayer(in_channels=4, out_channels=8, drop_rate=0.5, kernel=(3,1,1), pooling=(2,2,0))
    N, Cin, Cout, D, H, W = 2, 4, 8, 8, 8, 8
    kernel = (3, 1, 1)    # kernel_size, stride, padding
    pooling = (2, 2, 0)   # pool_kernel, pool_stride, pool_padding

    x = jax.random.normal(k_x, (N, Cin, D, H, W), dtype=jnp.float32)
    weight = 0.1 * jax.random.normal(k_w, (Cout, Cin, 3, 3, 3), dtype=jnp.float32)
    gamma = jax.random.uniform(k_g, (Cout,), minval=0.5, maxval=1.5, dtype=jnp.float32)
    beta = 0.1 * jax.random.normal(k_b, (Cout,), dtype=jnp.float32)
    running_mean = 0.1 * jax.random.normal(k_m, (Cout,), dtype=jnp.float32)
    running_var = jax.random.uniform(k_v, (Cout,), minval=0.5, maxval=1.5, dtype=jnp.float32)

    fwd = jax.jit(functools.partial(conv_layer_forward, kernel=kernel, pooling=pooling,
                                    relu_type="leaky"))
    out = jax.block_until_ready(fwd(x, weight, gamma, beta, running_mean, running_var))

    ref = _reference(x, weight, gamma, beta, running_mean, running_var, kernel, pooling)
    assert out.shape == ref.shape, (out.shape, ref.shape)
    # bf16 conv operands on both sides -> remaining diff is f32 accumulation order only.
    assert jnp.allclose(out, ref, atol=2e-3, rtol=2e-3), float(jnp.max(jnp.abs(out - ref)))
    print("KERNEL_OK")
</pallas_src>

<mosaic_0001>
module attributes {stable_mosaic.version = 11 : i64} {
  func.func @_fused_conv_pool_bn_relu_kernel(%arg0: i32, %arg1: memref<1x512x128xbf16, #tpu.memory_space<vmem>>, %arg2: memref<128x8xbf16, #tpu.memory_space<vmem>>, %arg3: memref<1x128xf32, #tpu.memory_space<vmem>>, %arg4: memref<1x128xf32, #tpu.memory_space<vmem>>, %arg5: memref<1x4x128xf32, #tpu.memory_space<vmem>>) attributes {dimension_semantics = [#tpu.dimension_semantics<parallel>], iteration_bounds = array<i64: 2>, scalar_prefetch = 0 : i64, scratch_operands = 0 : i64, tpu.core_type = #tpu.core_type<tc>, window_params = [{transform_indices = @transform_0, window_bounds = array<i64: 1, 512, 128>}, {pipeline_mode = #tpu.pipeline_mode<synchronous>, transform_indices = @transform_1, window_bounds = array<i64: 128, 8>}, {pipeline_mode = #tpu.pipeline_mode<synchronous>, transform_indices = @transform_2, window_bounds = array<i64: 1, 128>}, {pipeline_mode = #tpu.pipeline_mode<synchronous>, transform_indices = @transform_3, window_bounds = array<i64: 1, 128>}, {transform_indices = @transform_4, window_bounds = array<i64: 1, 4, 128>}]} {
    %c0 = arith.constant 0 : index
    %c0_0 = arith.constant 0 : index
    %0 = vector.load %arg2[%c0, %c0_0] : memref<128x8xbf16, #tpu.memory_space<vmem>>, vector<128x8xbf16>
    %c0_1 = arith.constant 0 : index
    %c0_2 = arith.constant 0 : index
    %c0_3 = arith.constant 0 : index
    %1 = vector.load %arg1[%c0_1, %c0_2, %c0_3] : memref<1x512x128xbf16, #tpu.memory_space<vmem>>, vector<1x128x128xbf16>
    %2 = vector.shape_cast %1 : vector<1x128x128xbf16> to vector<128x128xbf16>
    %cst = arith.constant dense<0.000000e+00> : vector<128x8xf32>
    %3 = tpu.matmul %2, %0, %cst {dimension_numbers = #tpu.dot_dimension_numbers<[1], [0], [0], [1], [0, 0, 1, 1], [], []>} : vector<128x128xbf16>, vector<128x8xbf16>, vector<128x8xf32> -> vector<128x8xf32>
    %4 = vector.extract_strided_slice %3 {offsets = [0, 0], sizes = [64, 8], strides = [1, 1]} : vector<128x8xf32> to vector<64x8xf32>
    %5 = vector.extract_strided_slice %3 {offsets = [64, 0], sizes = [64, 8], strides = [1, 1]} : vector<128x8xf32> to vector<64x8xf32>
    %6 = arith.maximumf %4, %5 : vector<64x8xf32>
    %7 = vector.extract_strided_slice %6 {offsets = [0, 0], sizes = [8, 8], strides = [1, 1]} : vector<64x8xf32> to vector<8x8xf32>
    %8 = vector.extract_strided_slice %6 {offsets = [8, 0], sizes = [8, 8], strides = [1, 1]} : vector<64x8xf32> to vector<8x8xf32>
    %9 = arith.maximumf %7, %8 : vector<8x8xf32>
    %10 = vector.extract_strided_slice %6 {offsets = [16, 0], sizes = [8, 8], strides = [1, 1]} : vector<64x8xf32> to vector<8x8xf32>
    %11 = vector.extract_strided_slice %6 {offsets = [24, 0], sizes = [8, 8], strides = [1, 1]} : vector<64x8xf32> to vector<8x8xf32>
    %12 = arith.maximumf %10, %11 : vector<8x8xf32>
    %13 = vector.extract_strided_slice %6 {offsets = [32, 0], sizes = [8, 8], strides = [1, 1]} : vector<64x8xf32> to vector<8x8xf32>
    %14 = vector.extract_strided_slice %6 {offsets = [40, 0], sizes = [8, 8], strides = [1, 1]} : vector<64x8xf32> to vector<8x8xf32>
    %15 = arith.maximumf %13, %14 : vector<8x8xf32>
    %16 = vector.extract_strided_slice %6 {offsets = [48, 0], sizes = [8, 8], strides = [1, 1]} : vector<64x8xf32> to vector<8x8xf32>
    %17 = vector.extract_strided_slice %6 {offsets = [56, 0], sizes = [8, 8], strides = [1, 1]} : vector<64x8xf32> to vector<8x8xf32>
    %18 = arith.maximumf %16, %17 : vector<8x8xf32>
    %19 = vector.extract_strided_slice %9 {offsets = [0, 0], sizes = [1, 8], strides = [1, 1]} : vector<8x8xf32> to vector<1x8xf32>
    %20 = vector.extract_strided_slice %9 {offsets = [1, 0], sizes = [1, 8], strides = [1, 1]} : vector<8x8xf32> to vector<1x8xf32>
    %21 = arith.maximumf %19, %20 : vector<1x8xf32>
    %22 = vector.extract_strided_slice %9 {offsets = [2, 0], sizes = [1, 8], strides = [1, 1]} : vector<8x8xf32> to vector<1x8xf32>
    %23 = vector.extract_strided_slice %9 {offsets = [3, 0], sizes = [1, 8], strides = [1, 1]} : vector<8x8xf32> to vector<1x8xf32>
    %24 = arith.maximumf %22, %23 : vector<1x8xf32>
    %25 = vector.extract_strided_slice %9 {offsets = [4, 0], sizes = [1, 8], strides = [1, 1]} : vector<8x8xf32> to vector<1x8xf32>
    %26 = vector.extract_strided_slice %9 {offsets = [5, 0], sizes = [1, 8], strides = [1, 1]} : vector<8x8xf32> to vector<1x8xf32>
    %27 = arith.maximumf %25, %26 : vector<1x8xf32>
    %28 = vector.extract_strided_slice %9 {offsets = [6, 0], sizes = [1, 8], strides = [1, 1]} : vector<8x8xf32> to vector<1x8xf32>
    %29 = vector.extract_strided_slice %9 {offsets = [7, 0], sizes = [1, 8], strides = [1, 1]} : vector<8x8xf32> to vector<1x8xf32>
    %30 = arith.maximumf %28, %29 : vector<1x8xf32>
    %31 = vector.extract_strided_slice %12 {offsets = [0, 0], sizes = [1, 8], strides = [1, 1]} : vector<8x8xf32> to vector<1x8xf32>
    %32 = vector.extract_strided_slice %12 {offsets = [1, 0], sizes = [1, 8], strides = [1, 1]} : vector<8x8xf32> to vector<1x8xf32>
    %33 = arith.maximumf %31, %32 : vector<1x8xf32>
    %34 = vector.extract_strided_slice %12 {offsets = [2, 0], sizes = [1, 8], strides = [1, 1]} : vector<8x8xf32> to vector<1x8xf32>
    %35 = vector.extract_strided_slice %12 {offsets = [3, 0], sizes = [1, 8], strides = [1, 1]} : vector<8x8xf32> to vector<1x8xf32>
    %36 = arith.maximumf %34, %35 : vector<1x8xf32>
    %37 = vector.extract_strided_slice %12 {offsets = [4, 0], sizes = [1, 8], strides = [1, 1]} : vector<8x8xf32> to vector<1x8xf32>
    %38 = vector.extract_strided_slice %12 {offsets = [5, 0], sizes = [1, 8], strides = [1, 1]} : vector<8x8xf32> to vector<1x8xf32>
    %39 = arith.maximumf %37, %38 : vector<1x8xf32>
    %40 = vector.extract_strided_slice %12 {offsets = [6, 0], sizes = [1, 8], strides = [1, 1]} : vector<8x8xf32> to vector<1x8xf32>
    %41 = vector.extract_strided_slice %12 {offsets = [7, 0], sizes = [1, 8], strides = [1, 1]} : vector<8x8xf32> to vector<1x8xf32>
    %42 = arith.maximumf %40, %41 : vector<1x8xf32>
    %43 = vector.extract_strided_slice %15 {offsets = [0, 0], sizes = [1, 8], strides = [1, 1]} : vector<8x8xf32> to vector<1x8xf32>
    %44 = vector.extract_strided_slice %15 {offsets = [1, 0], sizes = [1, 8], strides = [1, 1]} : vector<8x8xf32> to vector<1x8xf32>
    %45 = arith.maximumf %43, %44 : vector<1x8xf32>
    %46 = vector.extract_strided_slice %15 {offsets = [2, 0], sizes = [1, 8], strides = [1, 1]} : vector<8x8xf32> to vector<1x8xf32>
    %47 = vector.extract_strided_slice %15 {offsets = [3, 0], sizes = [1, 8], strides = [1, 1]} : vector<8x8xf32> to vector<1x8xf32>
    %48 = arith.maximumf %46, %47 : vector<1x8xf32>
    %49 = vector.extract_strided_slice %15 {offsets = [4, 0], sizes = [1, 8], strides = [1, 1]} : vector<8x8xf32> to vector<1x8xf32>
    %50 = vector.extract_strided_slice %15 {offsets = [5, 0], sizes = [1, 8], strides = [1, 1]} : vector<8x8xf32> to vector<1x8xf32>
    %51 = arith.maximumf %49, %50 : vector<1x8xf32>
    %52 = vector.extract_strided_slice %15 {offsets = [6, 0], sizes = [1, 8], strides = [1, 1]} : vector<8x8xf32> to vector<1x8xf32>
    %53 = vector.extract_strided_slice %15 {offsets = [7, 0], sizes = [1, 8], strides = [1, 1]} : vector<8x8xf32> to vector<1x8xf32>
    %54 = arith.maximumf %52, %53 : vector<1x8xf32>
    %55 = vector.extract_strided_slice %18 {offsets = [0, 0], sizes = [1, 8], strides = [1, 1]} : vector<8x8xf32> to vector<1x8xf32>
    %56 = vector.extract_strided_slice %18 {offsets = [1, 0], sizes = [1, 8], strides = [1, 1]} : vector<8x8xf32> to vector<1x8xf32>
    %57 = arith.maximumf %55, %56 : vector<1x8xf32>
    %58 = vector.extract_strided_slice %18 {offsets = [2, 0], sizes = [1, 8], strides = [1, 1]} : vector<8x8xf32> to vector<1x8xf32>
    %59 = vector.extract_strided_slice %18 {offsets = [3, 0], sizes = [1, 8], strides = [1, 1]} : vector<8x8xf32> to vector<1x8xf32>
    %60 = arith.maximumf %58, %59 : vector<1x8xf32>
    %61 = vector.extract_strided_slice %18 {offsets = [4, 0], sizes = [1, 8], strides = [1, 1]} : vector<8x8xf32> to vector<1x8xf32>
    %62 = vector.extract_strided_slice %18 {offsets = [5, 0], sizes = [1, 8], strides = [1, 1]} : vector<8x8xf32> to vector<1x8xf32>
    %63 = arith.maximumf %61, %62 : vector<1x8xf32>
    %64 = vector.extract_strided_slice %18 {offsets = [6, 0], sizes = [1, 8], strides = [1, 1]} : vector<8x8xf32> to vector<1x8xf32>
    %65 = vector.extract_strided_slice %18 {offsets = [7, 0], sizes = [1, 8], strides = [1, 1]} : vector<8x8xf32> to vector<1x8xf32>
    %66 = arith.maximumf %64, %65 : vector<1x8xf32>
    %67 = tpu.concatenate %21, %24, %27, %30, %33, %36, %39, %42, %45, %48, %51, %54, %57, %60, %63, %66 in 1 : vector<1x8xf32>, vector<1x8xf32>, vector<1x8xf32>, vector<1x8xf32>, vector<1x8xf32>, vector<1x8xf32>, vector<1x8xf32>, vector<1x8xf32>, vector<1x8xf32>, vector<1x8xf32>, vector<1x8xf32>, vector<1x8xf32>, vector<1x8xf32>, vector<1x8xf32>, vector<1x8xf32>, vector<1x8xf32> -> vector<1x128xf32>
    %c0_4 = arith.constant 0 : index
    %c128 = arith.constant 128 : index
    %c0_5 = arith.constant 0 : index
    %68 = vector.load %arg1[%c0_4, %c128, %c0_5] : memref<1x512x128xbf16, #tpu.memory_space<vmem>>, vector<1x128x128xbf16>
    %69 = vector.shape_cast %68 : vector<1x128x128xbf16> to vector<128x128xbf16>
    %cst_6 = arith.constant dense<0.000000e+00> : vector<128x8xf32>
    %70 = tpu.matmul %69, %0, %cst_6 {dimension_numbers = #tpu.dot_dimension_numbers<[1], [0], [0], [1], [0, 0, 1, 1], [], []>} : vector<128x128xbf16>, vector<128x8xbf16>, vector<128x8xf32> -> vector<128x8xf32>
    %71 = vector.extract_strided_slice %70 {offsets = [0, 0], sizes = [64, 8], strides = [1, 1]} : vector<128x8xf32> to vector<64x8xf32>
    %72 = vector.extract_strided_slice %70 {offsets = [64, 0], sizes = [64, 8], strides = [1, 1]} : vector<128x8xf32> to vector<64x8xf32>
    %73 = arith.maximumf %71, %72 : vector<64x8xf32>
    %74 = vector.extract_strided_slice %73 {offsets = [0, 0], sizes = [8, 8], strides = [1, 1]} : vector<64x8xf32> to vector<8x8xf32>
    %75 = vector.extract_strided_slice %73 {offsets = [8, 0], sizes = [8, 8], strides = [1, 1]} : vector<64x8xf32> to vector<8x8xf32>
    %76 = arith.maximumf %74, %75 : vector<8x8xf32>
    %77 = vector.extract_strided_slice %73 {offsets = [16, 0], sizes = [8, 8], strides = [1, 1]} : vector<64x8xf32> to vector<8x8xf32>
    %78 = vector.extract_strided_slice %73 {offsets = [24, 0], sizes = [8, 8], strides = [1, 1]} : vector<64x8xf32> to vector<8x8xf32>
    %79 = arith.maximumf %77, %78 : vector<8x8xf32>
    %80 = vector.extract_strided_slice %73 {offsets = [32, 0], sizes = [8, 8], strides = [1, 1]} : vector<64x8xf32> to vector<8x8xf32>
    %81 = vector.extract_strided_slice %73 {offsets = [40, 0], sizes = [8, 8], strides = [1, 1]} : vector<64x8xf32> to vector<8x8xf32>
    %82 = arith.maximumf %80, %81 : vector<8x8xf32>
    %83 = vector.extract_strided_slice %73 {offsets = [48, 0], sizes = [8, 8], strides = [1, 1]} : vector<64x8xf32> to vector<8x8xf32>
    %84 = vector.extract_strided_slice %73 {offsets = [56, 0], sizes = [8, 8], strides = [1, 1]} : vector<64x8xf32> to vector<8x8xf32>
    %85 = arith.maximumf %83, %84 : vector<8x8xf32>
    %86 = vector.extract_strided_slice %76 {offsets = [0, 0], sizes = [1, 8], strides = [1, 1]} : vector<8x8xf32> to vector<1x8xf32>
    %87 = vector.extract_strided_slice %76 {offsets = [1, 0], sizes = [1, 8], strides = [1, 1]} : vector<8x8xf32> to vector<1x8xf32>
    %88 = arith.maximumf %86, %87 : vector<1x8xf32>
    %89 = vector.extract_strided_slice %76 {offsets = [2, 0], sizes = [1, 8], strides = [1, 1]} : vector<8x8xf32> to vector<1x8xf32>
    %90 = vector.extract_strided_slice %76 {offsets = [3, 0], sizes = [1, 8], strides = [1, 1]} : vector<8x8xf32> to vector<1x8xf32>
    %91 = arith.maximumf %89, %90 : vector<1x8xf32>
    %92 = vector.extract_strided_slice %76 {offsets = [4, 0], sizes = [1, 8], strides = [1, 1]} : vector<8x8xf32> to vector<1x8xf32>
    %93 = vector.extract_strided_slice %76 {offsets = [5, 0], sizes = [1, 8], strides = [1, 1]} : vector<8x8xf32> to vector<1x8xf32>
    %94 = arith.maximumf %92, %93 : vector<1x8xf32>
    %95 = vector.extract_strided_slice %76 {offsets = [6, 0], sizes = [1, 8], strides = [1, 1]} : vector<8x8xf32> to vector<1x8xf32>
    %96 = vector.extract_strided_slice %76 {offsets = [7, 0], sizes = [1, 8], strides = [1, 1]} : vector<8x8xf32> to vector<1x8xf32>
    %97 = arith.maximumf %95, %96 : vector<1x8xf32>
    %98 = vector.extract_strided_slice %79 {offsets = [0, 0], sizes = [1, 8], strides = [1, 1]} : vector<8x8xf32> to vector<1x8xf32>
    %99 = vector.extract_strided_slice %79 {offsets = [1, 0], sizes = [1, 8], strides = [1, 1]} : vector<8x8xf32> to vector<1x8xf32>
    %100 = arith.maximumf %98, %99 : vector<1x8xf32>
    %101 = vector.extract_strided_slice %79 {offsets = [2, 0], sizes = [1, 8], strides = [1, 1]} : vector<8x8xf32> to vector<1x8xf32>
    %102 = vector.extract_strided_slice %79 {offsets = [3, 0], sizes = [1, 8], strides = [1, 1]} : vector<8x8xf32> to vector<1x8xf32>
    %103 = arith.maximumf %101, %102 : vector<1x8xf32>
    %104 = vector.extract_strided_slice %79 {offsets = [4, 0], sizes = [1, 8], strides = [1, 1]} : vector<8x8xf32> to vector<1x8xf32>
    %105 = vector.extract_strided_slice %79 {offsets = [5, 0], sizes = [1, 8], strides = [1, 1]} : vector<8x8xf32> to vector<1x8xf32>
    %106 = arith.maximumf %104, %105 : vector<1x8xf32>
    %107 = vector.extract_strided_slice %79 {offsets = [6, 0], sizes = [1, 8], strides = [1, 1]} : vector<8x8xf32> to vector<1x8xf32>
    %108 = vector.extract_strided_slice %79 {offsets = [7, 0], sizes = [1, 8], strides = [1, 1]} : vector<8x8xf32> to vector<1x8xf32>
    %109 = arith.maximumf %107, %108 : vector<1x8xf32>
    %110 = vector.extract_strided_slice %82 {offsets = [0, 0], sizes = [1, 8], strides = [1, 1]} : vector<8x8xf32> to vector<1x8xf32>
    %111 = vector.extract_strided_slice %82 {offsets = [1, 0], sizes = [1, 8], strides = [1, 1]} : vector<8x8xf32> to vector<1x8xf32>
    %112 = arith.maximumf %110, %111 : vector<1x8xf32>
    %113 = vector.extract_strided_slice %82 {offsets = [2, 0], sizes = [1, 8], strides = [1, 1]} : vector<8x8xf32> to vector<1x8xf32>
    %114 = vector.extract_strided_slice %82 {offsets = [3, 0], sizes = [1, 8], strides = [1, 1]} : vector<8x8xf32> to vector<1x8xf32>
    %115 = arith.maximumf %113, %114 : vector<1x8xf32>
    %116 = vector.extract_strided_slice %82 {offsets = [4, 0], sizes = [1, 8], strides = [1, 1]} : vector<8x8xf32> to vector<1x8xf32>
    %117 = vector.extract_strided_slice %82 {offsets = [5, 0], sizes = [1, 8], strides = [1, 1]} : vector<8x8xf32> to vector<1x8xf32>
    %118 = arith.maximumf %116, %117 : vector<1x8xf32>
    %119 = vector.extract_strided_slice %82 {offsets = [6, 0], sizes = [1, 8], strides = [1, 1]} : vector<8x8xf32> to vector<1x8xf32>
    %120 = vector.extract_strided_slice %82 {offsets = [7, 0], sizes = [1, 8], strides = [1, 1]} : vector<8x8xf32> to vector<1x8xf32>
    %121 = arith.maximumf %119, %120 : vector<1x8xf32>
    %122 = vector.extract_strided_slice %85 {offsets = [0, 0], sizes = [1, 8], strides = [1, 1]} : vector<8x8xf32> to vector<1x8xf32>
    %123 = vector.extract_strided_slice %85 {offsets = [1, 0], sizes = [1, 8], strides = [1, 1]} : vector<8x8xf32> to vector<1x8xf32>
    %124 = arith.maximumf %122, %123 : vector<1x8xf32>
    %125 = vector.extract_strided_slice %85 {offsets = [2, 0], sizes = [1, 8], strides = [1, 1]} : vector<8x8xf32> to vector<1x8xf32>
    %126 = vector.extract_strided_slice %85 {offsets = [3, 0], sizes = [1, 8], strides = [1, 1]} : vector<8x8xf32> to vector<1x8xf32>
    %127 = arith.maximumf %125, %126 : vector<1x8xf32>
    %128 = vector.extract_strided_slice %85 {offsets = [4, 0], sizes = [1, 8], strides = [1, 1]} : vector<8x8xf32> to vector<1x8xf32>
    %129 = vector.extract_strided_slice %85 {offsets = [5, 0], sizes = [1, 8], strides = [1, 1]} : vector<8x8xf32> to vector<1x8xf32>
    %130 = arith.maximumf %128, %129 : vector<1x8xf32>
    %131 = vector.extract_strided_slice %85 {offsets = [6, 0], sizes = [1, 8], strides = [1, 1]} : vector<8x8xf32> to vector<1x8xf32>
    %132 = vector.extract_strided_slice %85 {offsets = [7, 0], sizes = [1, 8], strides = [1, 1]} : vector<8x8xf32> to vector<1x8xf32>
    %133 = arith.maximumf %131, %132 : vector<1x8xf32>
    %134 = tpu.concatenate %88, %91, %94, %97, %100, %103, %106, %109, %112, %115, %118, %121, %124, %127, %130, %133 in 1 : vector<1x8xf32>, vector<1x8xf32>, vector<1x8xf32>, vector<1x8xf32>, vector<1x8xf32>, vector<1x8xf32>, vector<1x8xf32>, vector<1x8xf32>, vector<1x8xf32>, vector<1x8xf32>, vector<1x8xf32>, vector<1x8xf32>, vector<1x8xf32>, vector<1x8xf32>, vector<1x8xf32>, vector<1x8xf32> -> vector<1x128xf32>
    %c0_7 = arith.constant 0 : index
    %c256 = arith.constant 256 : index
    %c0_8 = arith.constant 0 : index
    %135 = vector.load %arg1[%c0_7, %c256, %c0_8] : memref<1x512x128xbf16, #tpu.memory_space<vmem>>, vector<1x128x128xbf16>
    %136 = vector.shape_cast %135 : vector<1x128x128xbf16> to vector<128x128xbf16>
    %cst_9 = arith.constant dense<0.000000e+00> : vector<128x8xf32>
    %137 = tpu.matmul %136, %0, %cst_9 {dimension_numbers = #tpu.dot_dimension_numbers<[1], [0], [0], [1], [0, 0, 1, 1], [], []>} : vector<128x128xbf16>, vector<128x8xbf16>, vector<128x8xf32> -> vector<128x8xf32>
    %138 = vector.extract_strided_slice %137 {offsets = [0, 0], sizes = [64, 8], strides = [1, 1]} : vector<128x8xf32> to vector<64x8xf32>
    %139 = vector.extract_strided_slice %137 {offsets = [64, 0], sizes = [64, 8], strides = [1, 1]} : vector<128x8xf32> to vector<64x8xf32>
    %140 = arith.maximumf %138, %139 : vector<64x8xf32>
    %141 = vector.extract_strided_slice %140 {offsets = [0, 0], sizes = [8, 8], strides = [1, 1]} : vector<64x8xf32> to vector<8x8xf32>
    %142 = vector.extract_strided_slice %140 {offsets = [8, 0], sizes = [8, 8], strides = [1, 1]} : vector<64x8xf32> to vector<8x8xf32>
    %143 = arith.maximumf %141, %142 : vector<8x8xf32>
    %144 = vector.extract_strided_slice %140 {offsets = [16, 0], sizes = [8, 8], strides = [1, 1]} : vector<64x8xf32> to vector<8x8xf32>
    %145 = vector.extract_strided_slice %140 {offsets = [24, 0], sizes = [8, 8], strides = [1, 1]} : vector<64x8xf32> to vector<8x8xf32>
    %146 = arith.maximumf %144, %145 : vector<8x8xf32>
    %147 = vector.extract_strided_slice %140 {offsets = [32, 0], sizes = [8, 8], strides = [1, 1]} : vector<64x8xf32> to vector<8x8xf32>
    %148 = vector.extract_strided_slice %140 {offsets = [40, 0], sizes = [8, 8], strides = [1, 1]} : vector<64x8xf32> to vector<8x8xf32>
    %149 = arith.maximumf %147, %148 : vector<8x8xf32>
    %150 = vector.extract_strided_slice %140 {offsets = [48, 0], sizes = [8, 8], strides = [1, 1]} : vector<64x8xf32> to vector<8x8xf32>
    %151 = vector.extract_strided_slice %140 {offsets = [56, 0], sizes = [8, 8], strides = [1, 1]} : vector<64x8xf32> to vector<8x8xf32>
    %152 = arith.maximumf %150, %151 : vector<8x8xf32>
    %153 = vector.extract_strided_slice %143 {offsets = [0, 0], sizes = [1, 8], strides = [1, 1]} : vector<8x8xf32> to vector<1x8xf32>
    %154 = vector.extract_strided_slice %143 {offsets = [1, 0], sizes = [1, 8], strides = [1, 1]} : vector<8x8xf32> to vector<1x8xf32>
    %155 = arith.maximumf %153, %154 : vector<1x8xf32>
    %156 = vector.extract_strided_slice %143 {offsets = [2, 0], sizes = [1, 8], strides = [1, 1]} : vector<8x8xf32> to vector<1x8xf32>
    %157 = vector.extract_strided_slice %143 {offsets = [3, 0], sizes = [1, 8], strides = [1, 1]} : vector<8x8xf32> to vector<1x8xf32>
    %158 = arith.maximumf %156, %157 : vector<1x8xf32>
    %159 = vector.extract_strided_slice %143 {offsets = [4, 0], sizes = [1, 8], strides = [1, 1]} : vector<8x8xf32> to vector<1x8xf32>
    %160 = vector.extract_strided_slice %143 {offsets = [5, 0], sizes = [1, 8], strides = [1, 1]} : vector<8x8xf32> to vector<1x8xf32>
    %161 = arith.maximumf %159, %160 : vector<1x8xf32>
    %162 = vector.extract_strided_slice %143 {offsets = [6, 0], sizes = [1, 8], strides = [1, 1]} : vector<8x8xf32> to vector<1x8xf32>
    %163 = vector.extract_strided_slice %143 {offsets = [7, 0], sizes = [1, 8], strides = [1, 1]} : vector<8x8xf32> to vector<1x8xf32>
    %164 = arith.maximumf %162, %163 : vector<1x8xf32>
    %165 = vector.extract_strided_slice %146 {offsets = [0, 0], sizes = [1, 8], strides = [1, 1]} : vector<8x8xf32> to vector<1x8xf32>
    %166 = vector.extract_strided_slice %146 {offsets = [1, 0], sizes = [1, 8], strides = [1, 1]} : vector<8x8xf32> to vector<1x8xf32>
    %167 = arith.maximumf %165, %166 : vector<1x8xf32>
    %168 = vector.extract_strided_slice %146 {offsets = [2, 0], sizes = [1, 8], strides = [1, 1]} : vector<8x8xf32> to vector<1x8xf32>
    %169 = vector.extract_strided_slice %146 {offsets = [3, 0], sizes = [1, 8], strides = [1, 1]} : vector<8x8xf32> to vector<1x8xf32>
    %170 = arith.maximumf %168, %169 : vector<1x8xf32>
    %171 = vector.extract_strided_slice %146 {offsets = [4, 0], sizes = [1, 8], strides = [1, 1]} : vector<8x8xf32> to vector<1x8xf32>
    %172 = vector.extract_strided_slice %146 {offsets = [5, 0], sizes = [1, 8], strides = [1, 1]} : vector<8x8xf32> to vector<1x8xf32>
    %173 = arith.maximumf %171, %172 : vector<1x8xf32>
    %174 = vector.extract_strided_slice %146 {offsets = [6, 0], sizes = [1, 8], strides = [1, 1]} : vector<8x8xf32> to vector<1x8xf32>
    %175 = vector.extract_strided_slice %146 {offsets = [7, 0], sizes = [1, 8], strides = [1, 1]} : vector<8x8xf32> to vector<1x8xf32>
    %176 = arith.maximumf %174, %175 : vector<1x8xf32>
    %177 = vector.extract_strided_slice %149 {offsets = [0, 0], sizes = [1, 8], strides = [1, 1]} : vector<8x8xf32> to vector<1x8xf32>
    %178 = vector.extract_strided_slice %149 {offsets = [1, 0], sizes = [1, 8], strides = [1, 1]} : vector<8x8xf32> to vector<1x8xf32>
    %179 = arith.maximumf %177, %178 : vector<1x8xf32>
    %180 = vector.extract_strided_slice %149 {offsets = [2, 0], sizes = [1, 8], strides = [1, 1]} : vector<8x8xf32> to vector<1x8xf32>
    %181 = vector.extract_strided_slice %149 {offsets = [3, 0], sizes = [1, 8], strides = [1, 1]} : vector<8x8xf32> to vector<1x8xf32>
    %182 = arith.maximumf %180, %181 : vector<1x8xf32>
    %183 = vector.extract_strided_slice %149 {offsets = [4, 0], sizes = [1, 8], strides = [1, 1]} : vector<8x8xf32> to vector<1x8xf32>
    %184 = vector.extract_strided_slice %149 {offsets = [5, 0], sizes = [1, 8], strides = [1, 1]} : vector<8x8xf32> to vector<1x8xf32>
    %185 = arith.maximumf %183, %184 : vector<1x8xf32>
    %186 = vector.extract_strided_slice %149 {offsets = [6, 0], sizes = [1, 8], strides = [1, 1]} : vector<8x8xf32> to vector<1x8xf32>
    %187 = vector.extract_strided_slice %149 {offsets = [7, 0], sizes = [1, 8], strides = [1, 1]} : vector<8x8xf32> to vector<1x8xf32>
    %188 = arith.maximumf %186, %187 : vector<1x8xf32>
    %189 = vector.extract_strided_slice %152 {offsets = [0, 0], sizes = [1, 8], strides = [1, 1]} : vector<8x8xf32> to vector<1x8xf32>
    %190 = vector.extract_strided_slice %152 {offsets = [1, 0], sizes = [1, 8], strides = [1, 1]} : vector<8x8xf32> to vector<1x8xf32>
    %191 = arith.maximumf %189, %190 : vector<1x8xf32>
    %192 = vector.extract_strided_slice %152 {offsets = [2, 0], sizes = [1, 8], strides = [1, 1]} : vector<8x8xf32> to vector<1x8xf32>
    %193 = vector.extract_strided_slice %152 {offsets = [3, 0], sizes = [1, 8], strides = [1, 1]} : vector<8x8xf32> to vector<1x8xf32>
    %194 = arith.maximumf %192, %193 : vector<1x8xf32>
    %195 = vector.extract_strided_slice %152 {offsets = [4, 0], sizes = [1, 8], strides = [1, 1]} : vector<8x8xf32> to vector<1x8xf32>
    %196 = vector.extract_strided_slice %152 {offsets = [5, 0], sizes = [1, 8], strides = [1, 1]} : vector<8x8xf32> to vector<1x8xf32>
    %197 = arith.maximumf %195, %196 : vector<1x8xf32>
    %198 = vector.extract_strided_slice %152 {offsets = [6, 0], sizes = [1, 8], strides = [1, 1]} : vector<8x8xf32> to vector<1x8xf32>
    %199 = vector.extract_strided_slice %152 {offsets = [7, 0], sizes = [1, 8], strides = [1, 1]} : vector<8x8xf32> to vector<1x8xf32>
    %200 = arith.maximumf %198, %199 : vector<1x8xf32>
    %201 = tpu.concatenate %155, %158, %161, %164, %167, %170, %173, %176, %179, %182, %185, %188, %191, %194, %197, %200 in 1 : vector<1x8xf32>, vector<1x8xf32>, vector<1x8xf32>, vector<1x8xf32>, vector<1x8xf32>, vector<1x8xf32>, vector<1x8xf32>, vector<1x8xf32>, vector<1x8xf32>, vector<1x8xf32>, vector<1x8xf32>, vector<1x8xf32>, vector<1x8xf32>, vector<1x8xf32>, vector<1x8xf32>, vector<1x8xf32> -> vector<1x128xf32>
    %c0_10 = arith.constant 0 : index
    %c384 = arith.constant 384 : index
    %c0_11 = arith.constant 0 : index
    %202 = vector.load %arg1[%c0_10, %c384, %c0_11] : memref<1x512x128xbf16, #tpu.memory_space<vmem>>, vector<1x128x128xbf16>
    %203 = vector.shape_cast %202 : vector<1x128x128xbf16> to vector<128x128xbf16>
    %cst_12 = arith.constant dense<0.000000e+00> : vector<128x8xf32>
    %204 = tpu.matmul %203, %0, %cst_12 {dimension_numbers = #tpu.dot_dimension_numbers<[1], [0], [0], [1], [0, 0, 1, 1], [], []>} : vector<128x128xbf16>, vector<128x8xbf16>, vector<128x8xf32> -> vector<128x8xf32>
    %205 = vector.extract_strided_slice %204 {offsets = [0, 0], sizes = [64, 8], strides = [1, 1]} : vector<128x8xf32> to vector<64x8xf32>
    %206 = vector.extract_strided_slice %204 {offsets = [64, 0], sizes = [64, 8], strides = [1, 1]} : vector<128x8xf32> to vector<64x8xf32>
    %207 = arith.maximumf %205, %206 : vector<64x8xf32>
    %208 = vector.extract_strided_slice %207 {offsets = [0, 0], sizes = [8, 8], strides = [1, 1]} : vector<64x8xf32> to vector<8x8xf32>
    %209 = vector.extract_strided_slice %207 {offsets = [8, 0], sizes = [8, 8], strides = [1, 1]} : vector<64x8xf32> to vector<8x8xf32>
    %210 = arith.maximumf %208, %209 : vector<8x8xf32>
    %211 = vector.extract_strided_slice %207 {offsets = [16, 0], sizes = [8, 8], strides = [1, 1]} : vector<64x8xf32> to vector<8x8xf32>
    %212 = vector.extract_strided_slice %207 {offsets = [24, 0], sizes = [8, 8], strides = [1, 1]} : vector<64x8xf32> to vector<8x8xf32>
    %213 = arith.maximumf %211, %212 : vector<8x8xf32>
    %214 = vector.extract_strided_slice %207 {offsets = [32, 0], sizes = [8, 8], strides = [1, 1]} : vector<64x8xf32> to vector<8x8xf32>
    %215 = vector.extract_strided_slice %207 {offsets = [40, 0], sizes = [8, 8], strides = [1, 1]} : vector<64x8xf32> to vector<8x8xf32>
    %216 = arith.maximumf %214, %215 : vector<8x8xf32>
    %217 = vector.extract_strided_slice %207 {offsets = [48, 0], sizes = [8, 8], strides = [1, 1]} : vector<64x8xf32> to vector<8x8xf32>
    %218 = vector.extract_strided_slice %207 {offsets = [56, 0], sizes = [8, 8], strides = [1, 1]} : vector<64x8xf32> to vector<8x8xf32>
    %219 = arith.maximumf %217, %218 : vector<8x8xf32>
    %220 = vector.extract_strided_slice %210 {offsets = [0, 0], sizes = [1, 8], strides = [1, 1]} : vector<8x8xf32> to vector<1x8xf32>
    %221 = vector.extract_strided_slice %210 {offsets = [1, 0], sizes = [1, 8], strides = [1, 1]} : vector<8x8xf32> to vector<1x8xf32>
    %222 = arith.maximumf %220, %221 : vector<1x8xf32>
    %223 = vector.extract_strided_slice %210 {offsets = [2, 0], sizes = [1, 8], strides = [1, 1]} : vector<8x8xf32> to vector<1x8xf32>
    %224 = vector.extract_strided_slice %210 {offsets = [3, 0], sizes = [1, 8], strides = [1, 1]} : vector<8x8xf32> to vector<1x8xf32>
    %225 = arith.maximumf %223, %224 : vector<1x8xf32>
    %226 = vector.extract_strided_slice %210 {offsets = [4, 0], sizes = [1, 8], strides = [1, 1]} : vector<8x8xf32> to vector<1x8xf32>
    %227 = vector.extract_strided_slice %210 {offsets = [5, 0], sizes = [1, 8], strides = [1, 1]} : vector<8x8xf32> to vector<1x8xf32>
    %228 = arith.maximumf %226, %227 : vector<1x8xf32>
    %229 = vector.extract_strided_slice %210 {offsets = [6, 0], sizes = [1, 8], strides = [1, 1]} : vector<8x8xf32> to vector<1x8xf32>
    %230 = vector.extract_strided_slice %210 {offsets = [7, 0], sizes = [1, 8], strides = [1, 1]} : vector<8x8xf32> to vector<1x8xf32>
    %231 = arith.maximumf %229, %230 : vector<1x8xf32>
    %232 = vector.extract_strided_slice %213 {offsets = [0, 0], sizes = [1, 8], strides = [1, 1]} : vector<8x8xf32> to vector<1x8xf32>
    %233 = vector.extract_strided_slice %213 {offsets = [1, 0], sizes = [1, 8], strides = [1, 1]} : vector<8x8xf32> to vector<1x8xf32>
    %234 = arith.maximumf %232, %233 : vector<1x8xf32>
    %235 = vector.extract_strided_slice %213 {offsets = [2, 0], sizes = [1, 8], strides = [1, 1]} : vector<8x8xf32> to vector<1x8xf32>
    %236 = vector.extract_strided_slice %213 {offsets = [3, 0], sizes = [1, 8], strides = [1, 1]} : vector<8x8xf32> to vector<1x8xf32>
    %237 = arith.maximumf %235, %236 : vector<1x8xf32>
    %238 = vector.extract_strided_slice %213 {offsets = [4, 0], sizes = [1, 8], strides = [1, 1]} : vector<8x8xf32> to vector<1x8xf32>
    %239 = vector.extract_strided_slice %213 {offsets = [5, 0], sizes = [1, 8], strides = [1, 1]} : vector<8x8xf32> to vector<1x8xf32>
    %240 = arith.maximumf %238, %239 : vector<1x8xf32>
    %241 = vector.extract_strided_slice %213 {offsets = [6, 0], sizes = [1, 8], strides = [1, 1]} : vector<8x8xf32> to vector<1x8xf32>
    %242 = vector.extract_strided_slice %213 {offsets = [7, 0], sizes = [1, 8], strides = [1, 1]} : vector<8x8xf32> to vector<1x8xf32>
    %243 = arith.maximumf %241, %242 : vector<1x8xf32>
    %244 = vector.extract_strided_slice %216 {offsets = [0, 0], sizes = [1, 8], strides = [1, 1]} : vector<8x8xf32> to vector<1x8xf32>
    %245 = vector.extract_strided_slice %216 {offsets = [1, 0], sizes = [1, 8], strides = [1, 1]} : vector<8x8xf32> to vector<1x8xf32>
    %246 = arith.maximumf %244, %245 : vector<1x8xf32>
    %247 = vector.extract_strided_slice %216 {offsets = [2, 0], sizes = [1, 8], strides = [1, 1]} : vector<8x8xf32> to vector<1x8xf32>
    %248 = vector.extract_strided_slice %216 {offsets = [3, 0], sizes = [1, 8], strides = [1, 1]} : vector<8x8xf32> to vector<1x8xf32>
    %249 = arith.maximumf %247, %248 : vector<1x8xf32>
    %250 = vector.extract_strided_slice %216 {offsets = [4, 0], sizes = [1, 8], strides = [1, 1]} : vector<8x8xf32> to vector<1x8xf32>
    %251 = vector.extract_strided_slice %216 {offsets = [5, 0], sizes = [1, 8], strides = [1, 1]} : vector<8x8xf32> to vector<1x8xf32>
    %252 = arith.maximumf %250, %251 : vector<1x8xf32>
    %253 = vector.extract_strided_slice %216 {offsets = [6, 0], sizes = [1, 8], strides = [1, 1]} : vector<8x8xf32> to vector<1x8xf32>
    %254 = vector.extract_strided_slice %216 {offsets = [7, 0], sizes = [1, 8], strides = [1, 1]} : vector<8x8xf32> to vector<1x8xf32>
    %255 = arith.maximumf %253, %254 : vector<1x8xf32>
    %256 = vector.extract_strided_slice %219 {offsets = [0, 0], sizes = [1, 8], strides = [1, 1]} : vector<8x8xf32> to vector<1x8xf32>
    %257 = vector.extract_strided_slice %219 {offsets = [1, 0], sizes = [1, 8], strides = [1, 1]} : vector<8x8xf32> to vector<1x8xf32>
    %258 = arith.maximumf %256, %257 : vector<1x8xf32>
    %259 = vector.extract_strided_slice %219 {offsets = [2, 0], sizes = [1, 8], strides = [1, 1]} : vector<8x8xf32> to vector<1x8xf32>
    %260 = vector.extract_strided_slice %219 {offsets = [3, 0], sizes = [1, 8], strides = [1, 1]} : vector<8x8xf32> to vector<1x8xf32>
    %261 = arith.maximumf %259, %260 : vector<1x8xf32>
    %262 = vector.extract_strided_slice %219 {offsets = [4, 0], sizes = [1, 8], strides = [1, 1]} : vector<8x8xf32> to vector<1x8xf32>
    %263 = vector.extract_strided_slice %219 {offsets = [5, 0], sizes = [1, 8], strides = [1, 1]} : vector<8x8xf32> to vector<1x8xf32>
    %264 = arith.maximumf %262, %263 : vector<1x8xf32>
    %265 = vector.extract_strided_slice %219 {offsets = [6, 0], sizes = [1, 8], strides = [1, 1]} : vector<8x8xf32> to vector<1x8xf32>
    %266 = vector.extract_strided_slice %219 {offsets = [7, 0], sizes = [1, 8], strides = [1, 1]} : vector<8x8xf32> to vector<1x8xf32>
    %267 = arith.maximumf %265, %266 : vector<1x8xf32>
    %268 = tpu.concatenate %222, %225, %228, %231, %234, %237, %240, %243, %246, %249, %252, %255, %258, %261, %264, %267 in 1 : vector<1x8xf32>, vector<1x8xf32>, vector<1x8xf32>, vector<1x8xf32>, vector<1x8xf32>, vector<1x8xf32>, vector<1x8xf32>, vector<1x8xf32>, vector<1x8xf32>, vector<1x8xf32>, vector<1x8xf32>, vector<1x8xf32>, vector<1x8xf32>, vector<1x8xf32>, vector<1x8xf32>, vector<1x8xf32> -> vector<1x128xf32>
    %269 = tpu.concatenate %67, %134, %201, %268 in 0 : vector<1x128xf32>, vector<1x128xf32>, vector<1x128xf32>, vector<1x128xf32> -> vector<4x128xf32>
    %c0_13 = arith.constant 0 : index
    %c0_14 = arith.constant 0 : index
    %270 = vector.load %arg3[%c0_13, %c0_14] : memref<1x128xf32, #tpu.memory_space<vmem>>, vector<1x128xf32>
    %271 = vector.broadcast %270 : vector<1x128xf32> to vector<4x128xf32>
    %272 = arith.mulf %269, %271 : vector<4x128xf32>
    %c0_15 = arith.constant 0 : index
    %c0_16 = arith.constant 0 : index
    %273 = vector.load %arg4[%c0_15, %c0_16] : memref<1x128xf32, #tpu.memory_space<vmem>>, vector<1x128xf32>
    %274 = vector.broadcast %273 : vector<1x128xf32> to vector<4x128xf32>
    %275 = arith.addf %272, %274 : vector<4x128xf32>
    %cst_17 = arith.constant 0.000000e+00 : f32
    %276 = vector.broadcast %cst_17 : f32 to vector<4x128xf32>
    %277 = arith.cmpf oge, %275, %276 : vector<4x128xf32>
    %cst_18 = arith.constant 0.00999999977 : f32
    %278 = vector.broadcast %cst_18 : f32 to vector<4x128xf32>
    %279 = arith.mulf %278, %275 : vector<4x128xf32>
    %280 = arith.select %277, %275, %279 : vector<4x128xi1>, vector<4x128xf32>
    %c0_19 = arith.constant 0 : index
    %c0_20 = arith.constant 0 : index
    %c0_21 = arith.constant 0 : index
    %281 = vector.load %arg5[%c0_19, %c0_20, %c0_21] : memref<1x4x128xf32, #tpu.memory_space<vmem>>, vector<1x4x128xf32>
    %282 = vector.shape_cast %281 : vector<1x4x128xf32> to vector<4x128xf32>
    %283 = vector.shape_cast %280 : vector<4x128xf32> to vector<1x4x128xf32>
    tpu.vector_store %arg5[%c0_19, %c0_20, %c0_21], %283 {strides = array<i32>} : memref<1x4x128xf32, #tpu.memory_space<vmem>>, vector<1x4x128xf32>,
    return
  }
  func.func @transform_0(%arg0: i32) -> (i32, i32, i32) {
    %c0_i32 = arith.constant 0 : i32
    %c0_i32_0 = arith.constant 0 : i32
    %c0_i32_1 = arith.constant 0 : i32
    return %arg0, %c0_i32, %c0_i32_0 : i32, i32, i32
  }
  func.func @transform_1(%arg0: i32) -> (i32, i32) {
    %c0_i32 = arith.constant 0 : i32
    %c0_i32_0 = arith.constant 0 : i32
    %c0_i32_1 = arith.constant 0 : i32
    return %c0_i32, %c0_i32_0 : i32, i32
  }
  func.func @transform_2(%arg0: i32) -> (i32, i32) {
    %c0_i32 = arith.constant 0 : i32
    %c0_i32_0 = arith.constant 0 : i32
    %c0_i32_1 = arith.constant 0 : i32
    return %c0_i32, %c0_i32_0 : i32, i32
  }
  func.func @transform_3(%arg0: i32) -> (i32, i32) {
    %c0_i32 = arith.constant 0 : i32
    %c0_i32_0 = arith.constant 0 : i32
    %c0_i32_1 = arith.constant 0 : i32
    return %c0_i32, %c0_i32_0 : i32, i32
  }
  func.func @transform_4(%arg0: i32) -> (i32, i32, i32) {
    %c0_i32 = arith.constant 0 : i32
    %c0_i32_0 = arith.constant 0 : i32
    %c0_i32_1 = arith.constant 0 : i32
    return %arg0, %c0_i32, %c0_i32_0 : i32, i32, i32
  }
}

</mosaic_0001>

<llo_original>
// kernel: conv_layer_forward.1
$region0: #{conv_layer_forward.1}
  #allocation0 [shape = 'u32[]', space=smem, size = 0x4, offset = 0x4, fixed_abs, tag = 'smem constant byte address 0x4 - core index']
  #allocation1 [shape = 'u32[144,128]{1,0:T(1,128)}', space=vmem, size = 0x12000, scoped, tag = 'internal scratch']
  %s0 = inlined_call_operand.vmem [shape: bf16[2,512,128], index: 0, kind: input, shape index: {}]
  %s1 = inlined_call_operand.vmem [shape: bf16[128,8], index: 1, kind: input, shape index: {}]
  %s2 = inlined_call_operand.vmem [shape: f32[1,128], index: 2, kind: input, shape index: {}]
  %s3 = inlined_call_operand.vmem [shape: f32[1,128], index: 3, kind: input, shape index: {}]
  %s4 = inlined_call_operand.vmem [shape: f32[2,4,128], index: 4, kind: output, shape index: {}]
  %s5 = sld [smem:[#allocation0]]
  $region49: #{conv_layer_forward.1} parent=0
    _
  %s7 = ssub.s32 1, %s5
  %s8 = scalar_select 0, %s7, %s5
  loop: start=0, step=1, limit=4
  $region2: #{conv_layer_forward.1} parent=0 // loop_pre_header
    _
  $region3: #{conv_layer_forward.1} parent=0 // loop_header
    %s10 = sphi 0, %s14
    %p11 = scmp.ge.s32.totalorder %s10, 4
    %s20 = sphi 0, %s22
    %s23 = sphi 0, %s20
    %s24 = sphi 0, %s23
    %s40 = sphi 0, %s24
    %s44 = sphi 0, %s44
    %s46 = sphi 0, %s44
    %s47 = sphi 0, %s46
    %s61 = sphi 0, %s47
    %s65 = sphi 0, %s65
    %s67 = sphi 0, %s65
    %s68 = sphi 0, %s67
    %s82 = sphi 0, %s68
    %s86 = sphi 0, %s86
    %s88 = sphi 0, %s86
    %s89 = sphi 0, %s88
    %s103 = sphi 0, %s89
    %s109 = sphi 0, %s111
    %s112 = sphi 0, %s109
    %s113 = sphi 0, %s112
    %s129 = sphi 0, %s113
  $region4: #{conv_layer_forward.1} parent=0 // loop_header_branch
    %13 = sbr.rel (%p11) target = $region8
  $region5: #{conv_layer_forward.1} parent=0 // loop_body
    %s15 = ssub.s32 %s10, 1
    %s16 = ssub.s32 %s10, 2
    %s17 = sadd.s32 %s10, 1
    %s18 = ssub.s32 %s10, %s17
    %p19 = scmp.eq.s32.totalorder %s18, 0
    %s21 = sadd.s32 %s20, 1
    %s22 = scalar_select %p19, %s20, %s21
    %p25 = pneg %p19
    %p26 = scmp.eq.s32.totalorder %s10, 1
    %p27 = por %p25, %p26
    %p28 = scmp.ne.s32.totalorder %s20, %s23
    %p29 = scmp.eq.s32.totalorder %s10, 0
    %p30 = por %p28, %p29
    %p31 = scmp.ne.s32.totalorder %s20, %s23
    %p32 = scmp.eq.s32.totalorder %s15, 1
    %p33 = por %p31, %p32
    %p34 = scmp.ne.s32.totalorder %s23, %s24
    %p35 = scmp.eq.s32.totalorder %s15, 0
    %p36 = por %p34, %p35
    %p37 = scmp.ne.s32.totalorder %s23, %s24
    %p38 = scmp.eq.s32.totalorder %s16, 1
    %p39 = por %p37, %p38
    %p41 = scmp.ne.s32.totalorder %s24, %s40
    %p42 = scmp.eq.s32.totalorder %s16, 0
    %p43 = por %p41, %p42
    %s45 = sadd.s32 %s44, 1
    %p48 = scmp.eq.s32.totalorder %s10, 1
    %p49 = scmp.ne.s32.totalorder %s44, %s46
    %p50 = scmp.eq.s32.totalorder %s10, 0
    %p51 = por %p49, %p50
    %p52 = scmp.ne.s32.totalorder %s44, %s46
    %p53 = scmp.eq.s32.totalorder %s15, 1
    %p54 = por %p52, %p53
    %p55 = scmp.ne.s32.totalorder %s46, %s47
    %p56 = scmp.eq.s32.totalorder %s15, 0
    %p57 = por %p55, %p56
    %p58 = scmp.ne.s32.totalorder %s46, %s47
    %p59 = scmp.eq.s32.totalorder %s16, 1
    %p60 = por %p58, %p59
    %p62 = scmp.ne.s32.totalorder %s47, %s61
    %p63 = scmp.eq.s32.totalorder %s16, 0
    %p64 = por %p62, %p63
    %s66 = sadd.s32 %s65, 1
    %p69 = scmp.eq.s32.totalorder %s10, 1
    %p70 = scmp.ne.s32.totalorder %s65, %s67
    %p71 = scmp.eq.s32.totalorder %s10, 0
    %p72 = por %p70, %p71
    %p73 = scmp.ne.s32.totalorder %s65, %s67
    %p74 = scmp.eq.s32.totalorder %s15, 1
    %p75 = por %p73, %p74
    %p76 = scmp.ne.s32.totalorder %s67, %s68
    %p77 = scmp.eq.s32.totalorder %s15, 0
    %p78 = por %p76, %p77
    %p79 = scmp.ne.s32.totalorder %s67, %s68
    %p80 = scmp.eq.s32.totalorder %s16, 1
    %p81 = por %p79, %p80
    %p83 = scmp.ne.s32.totalorder %s68, %s82
    %p84 = scmp.eq.s32.totalorder %s16, 0
    %p85 = por %p83, %p84
    %s87 = sadd.s32 %s86, 1
    %p90 = scmp.eq.s32.totalorder %s10, 1
    %p91 = scmp.ne.s32.totalorder %s86, %s88
    %p92 = scmp.eq.s32.totalorder %s10, 0
    %p93 = por %p91, %p92
    %p94 = scmp.ne.s32.totalorder %s86, %s88
    %p95 = scmp.eq.s32.totalorder %s15, 1
    %p96 = por %p94, %p95
    %p97 = scmp.ne.s32.totalorder %s88, %s89
    %p98 = scmp.eq.s32.totalorder %s15, 0
    %p99 = por %p97, %p98
    %p100 = scmp.ne.s32.totalorder %s88, %s89
    %p101 = scmp.eq.s32.totalorder %s16, 1
    %p102 = por %p100, %p101
    %p104 = scmp.ne.s32.totalorder %s89, %s103
    %p105 = scmp.eq.s32.totalorder %s16, 0
    %p106 = por %p104, %p105
    %s107 = ssub.s32 %s10, %s17
    %p108 = scmp.eq.s32.totalorder %s107, 0
    %s110 = sadd.s32 %s109, 1
    %s111 = scalar_select %p108, %s109, %s110
    %p114 = pneg %p108
    %p115 = scmp.eq.s32.totalorder %s10, 1
    %p116 = por %p114, %p115
    %p117 = scmp.ne.s32.totalorder %s109, %s112
    %p118 = scmp.eq.s32.totalorder %s10, 0
    %p119 = por %p117, %p118
    %p120 = scmp.ne.s32.totalorder %s109, %s112
    %p121 = scmp.eq.s32.totalorder %s15, 1
    %p122 = por %p120, %p121
    %p123 = scmp.ne.s32.totalorder %s112, %s113
    %p124 = scmp.eq.s32.totalorder %s15, 0
    %p125 = por %p123, %p124
    %p126 = scmp.ne.s32.totalorder %s112, %s113
    %p127 = scmp.eq.s32.totalorder %s16, 1
    %p128 = por %p126, %p127
    %p130 = scmp.ne.s32.totalorder %s113, %s129
    %p131 = scmp.eq.s32.totalorder %s16, 0
    %p132 = por %p130, %p131
    %p133 = scmp.le.s32.totalorder 1, %s10
    %p134 = scmp.lt.s32.totalorder %s10, 3
    %p135 = pnand %p133, %p134
    %p136 = pneg %p135
    // Predicated region
    $region9: #{conv_layer_forward.1} parent=5 // pred_check
      _
    $region10: #{conv_layer_forward.1} parent=5 // pred_check_branch
      %138 = sbr.rel (%p135) target = $region12
    $region11: #{conv_layer_forward.1} parent=5 // pred_region
      %s139 = ssub.s32 %s10, 1
      // Predicated region
      $region13: #{conv_layer_forward.1} parent=11 // pred_check
        %p140 = pneg %p57
      $region14: #{conv_layer_forward.1} parent=11 // pred_check_branch
        %142 = sbr.rel (%p140) target = $region16
      $region15: #{conv_layer_forward.1} parent=11 // pred_region
        _
      $region16: #{conv_layer_forward.1} parent=11 // pred_fallthru
        _
      // Predicated region
      $region17: #{conv_layer_forward.1} parent=11 // pred_check
        %p143 = pneg %p78
      $region18: #{conv_layer_forward.1} parent=11 // pred_check_branch
        %145 = sbr.rel (%p143) target = $region20
      $region19: #{conv_layer_forward.1} parent=11 // pred_region
        _
      $region20: #{conv_layer_forward.1} parent=11 // pred_fallthru
        _
      // Predicated region
      $region21: #{conv_layer_forward.1} parent=11 // pred_check
        %p146 = pneg %p99
      $region22: #{conv_layer_forward.1} parent=11 // pred_check_branch
        %148 = sbr.rel (%p146) target = $region24
      $region23: #{conv_layer_forward.1} parent=11 // pred_region
        _
      $region24: #{conv_layer_forward.1} parent=11 // pred_fallthru
        _
    $region12: #{conv_layer_forward.1} parent=5 // pred_fallthru
      _
    %p149 = scmp.lt.s32.totalorder %s10, 2
    // Predicated region
    $region25: #{conv_layer_forward.1} parent=5 // pred_check
      %p150 = pneg %p149
    $region26: #{conv_layer_forward.1} parent=5 // pred_check_branch
      %152 = sbr.rel (%p150) target = $region28
    $region27: #{conv_layer_forward.1} parent=5 // pred_region
      // Predicated region
      $region29: #{conv_layer_forward.1} parent=27 // pred_check
        %p153 = pneg %p30
      $region30: #{conv_layer_forward.1} parent=27 // pred_check_branch
        %155 = sbr.rel (%p153) target = $region32
      $region31: #{conv_layer_forward.1} parent=27 // pred_region
        %p156 = scmp.lt.s32.totalorder %s10, 1
        %s157 = scalar_select %p156, %s10, 1
        %s158 = smul.addr %s157, 64
        %s159 = smul.addr %s158, 4
        %s160 = scalar_lea.vmem %s0, %s159
      $region32: #{conv_layer_forward.1} parent=27 // pred_fallthru
        _
    $region28: #{conv_layer_forward.1} parent=5 // pred_fallthru
      _
    %p161 = scmp.le.s32.totalorder 1, %s10
    %p162 = scmp.lt.s32.totalorder %s10, 3
    %p163 = pnand %p161, %p162
    %p164 = pneg %p163
    // Predicated region
    $region33: #{conv_layer_forward.1} parent=5 // pred_check
      _
    $region34: #{conv_layer_forward.1} parent=5 // pred_check_branch
      %166 = sbr.rel (%p163) target = $region36
    $region35: #{conv_layer_forward.1} parent=5 // pred_region
      %s167 = ssub.s32 %s10, 1
      %p168 = scmp.lt.s32.totalorder %s15, 1
      %s169 = scalar_select %p168, %s15, 1
      %s170 = smul.addr %s169, 64
      %s171 = smul.addr %s170, 4
      %s172 = scalar_lea.vmem %s0, %s171
      %p173 = pneg %p36
      %p174 = pneg %p33
      %p175 = pneg %p57
      %p176 = pneg %p54
      %p177 = pneg %p78
      %p178 = pneg %p75
      %p179 = pneg %p99
      %p180 = pneg %p96
      %p181 = pneg %p125
      %p182 = pneg %p122
      %p183 = scmp.lt.s32.totalorder %s15, 1
      %s184 = scalar_select %p183, %s15, 1
      %s185 = smul.addr %s184, 4
      %s186 = scalar_lea.vmem %s4, %s185
      %p187 = scmp.lt.s32.totalorder %s15, 1
      %s188 = scalar_select %p187, %s15, 1
      %s189 = smul.addr %s188, 64
      %s190 = smul.addr %s189, 4
      %s191 = scalar_lea.vmem %s0, %s190
      %p192 = scmp.lt.s32.totalorder %s15, 1
      %s193 = scalar_select %p192, %s15, 1
      %s194 = smul.addr %s193, 4
      %s195 = scalar_lea.vmem %s4, %s194
      %v197 = vld [vmem:[%s1] sm:$0xf]
      %v198 = vld [vmem:[%s1 + $0x4] sm:$0xf]
      %v199 = vld [vmem:[%s1 + $0x8] sm:$0xf]
      %v200 = vld [vmem:[%s1 + $0xc] sm:$0xf]
      %v201 = vld [vmem:[%s1 + $0x10] sm:$0xf]
      %v202 = vld [vmem:[%s1 + $0x14] sm:$0xf]
      %v203 = vld [vmem:[%s1 + $0x18] sm:$0xf]
      %v204 = vld [vmem:[%s1 + $0x1c] sm:$0xf]
      %v205 = vld [vmem:[%s1 + $0x20] sm:$0xf]
      %v206 = vld [vmem:[%s1 + $0x24] sm:$0xf]
      %v207 = vld [vmem:[%s1 + $0x28] sm:$0xf]
      %v208 = vld [vmem:[%s1 + $0x2c] sm:$0xf]
      %v209 = vld [vmem:[%s1 + $0x30] sm:$0xf]
      %v210 = vld [vmem:[%s1 + $0x34] sm:$0xf]
      %v211 = vld [vmem:[%s1 + $0x38] sm:$0xf]
      %v212 = vld [vmem:[%s1 + $0x3c] sm:$0xf]
      %v213 = vld [vmem:[%s191] sm:$0xf]
      %v214 = vld [vmem:[%s191 + $0x4] sm:$0xf]
      %v215 = vld [vmem:[%s191 + $0x8] sm:$0xf]
      %v216 = vld [vmem:[%s191 + $0xc] sm:$0xf]
      %v217 = vld [vmem:[%s191 + $0x10] sm:$0xf]
      %v218 = vld [vmem:[%s191 + $0x14] sm:$0xf]
      %v219 = vld [vmem:[%s191 + $0x18] sm:$0xf]
      %v220 = vld [vmem:[%s191 + $0x1c] sm:$0xf]
      %v221 = vld [vmem:[%s191 + $0x20] sm:$0xf]
      %v222 = vld [vmem:[%s191 + $0x24] sm:$0xf]
      %v223 = vld [vmem:[%s191 + $0x28] sm:$0xf]
      %v224 = vld [vmem:[%s191 + $0x2c] sm:$0xf]
      %v225 = vld [vmem:[%s191 + $0x30] sm:$0xf]
      %v226 = vld [vmem:[%s191 + $0x34] sm:$0xf]
      %v227 = vld [vmem:[%s191 + $0x38] sm:$0xf]
      %v228 = vld [vmem:[%s191 + $0x3c] sm:$0xf]
      %v245 = vunpack.c.l.b16 %v213
      %v246 = vunpack.c.l.b16 %v214
      %v247 = vunpack.c.l.b16 %v215
      %v248 = vunpack.c.l.b16 %v216
      %v249 = vunpack.c.l.b16 %v217
      %v250 = vunpack.c.l.b16 %v218
      %v251 = vunpack.c.l.b16 %v219
      %v252 = vunpack.c.l.b16 %v220
      %v253 = vunpack.c.l.b16 %v221
      %v254 = vunpack.c.l.b16 %v222
      %v255 = vunpack.c.l.b16 %v223
      %v256 = vunpack.c.l.b16 %v224
      %v257 = vunpack.c.l.b16 %v225
      %v258 = vunpack.c.l.b16 %v226
      %v259 = vunpack.c.l.b16 %v227
      %v260 = vunpack.c.l.b16 %v228
      %v261 = vpack.c.b16 %v246, %v245
      %v262 = vpack.c.b16 %v248, %v247
      %v263 = vpack.c.b16 %v250, %v249
      %v264 = vpack.c.b16 %v252, %v251
      %v265 = vpack.c.b16 %v254, %v253
      %v266 = vpack.c.b16 %v256, %v255
      %v267 = vpack.c.b16 %v258, %v257
      %v268 = vpack.c.b16 %v260, %v259
      %v293 = vunpack.c.l.b16 %v197
      %v294 = vunpack.c.l.b16 %v198
      %v295 = vunpack.c.l.b16 %v199
      %v296 = vunpack.c.l.b16 %v200
      %v297 = vunpack.c.l.b16 %v201
      %v298 = vunpack.c.l.b16 %v202
      %v299 = vunpack.c.l.b16 %v203
      %v300 = vunpack.c.l.b16 %v204
      %v301 = vunpack.c.l.b16 %v205
      %v302 = vunpack.c.l.b16 %v206
      %v303 = vunpack.c.l.b16 %v207
      %v304 = vunpack.c.l.b16 %v208
      %v305 = vunpack.c.l.b16 %v209
      %v306 = vunpack.c.l.b16 %v210
      %v307 = vunpack.c.l.b16 %v211
      %v308 = vunpack.c.l.b16 %v212
      %v309 = vpack.c.b16 %v294, %v293
      %v310 = vpack.c.b16 %v296, %v295
      %v311 = vpack.c.b16 %v298, %v297
      %v312 = vpack.c.b16 %v300, %v299
      %v313 = vpack.c.b16 %v302, %v301
      %v314 = vpack.c.b16 %v304, %v303
      %v315 = vpack.c.b16 %v306, %v305
      %v316 = vpack.c.b16 %v308, %v307
      %325 = vmatprep.subr.bf16.mxu0 0
      %326 = vmatpush1.bf16.msra.mxu0 %v316
      %327 = vmatprep.subr.bf16.mxu0 0
      %328 = vmatpush1.bf16.msra.mxu0 %v315
      %329 = vmatprep.subr.bf16.mxu0 0
      %330 = vmatpush1.bf16.msra.mxu0 %v314
      %331 = vmatprep.subr.bf16.mxu0 0
      %332 = vmatpush1.bf16.msra.mxu0 %v313
      %333 = vmatprep.subr.bf16.mxu0 0
      %334 = vmatpush1.bf16.msra.mxu0 %v312
      %335 = vmatprep.subr.bf16.mxu0 0
      %336 = vmatpush1.bf16.msra.mxu0 %v311
      %337 = vmatprep.subr.bf16.mxu0 0
      %338 = vmatpush1.bf16.msra.mxu0 %v310
      %339 = vmatprep.subr.bf16.mxu0 0
      %340 = vmatpush1.bf16.msra.mxu0 %v309
      %341 = vmatprep.subr.bf16.mxu0 0
      %342 = vmatpush2.bf16.msra.mxu0 0
      %343 = vmatprep.subr.bf16.mxu0 0
      %344 = vmatpush2.bf16.msra.mxu0 0
      %345 = vmatprep.subr.bf16.mxu0 0
      %346 = vmatpush2.bf16.msra.mxu0 0
      %347 = vmatprep.subr.bf16.mxu0 0
      %348 = vmatpush2.bf16.msra.mxu0 0
      %349 = vmatprep.subr.bf16.mxu0 0
      %350 = vmatpush2.bf16.msra.mxu0 0
      %351 = vmatprep.subr.bf16.mxu0 0
      %352 = vmatpush2.bf16.msra.mxu0 0
      %353 = vmatprep.subr.bf16.mxu0 0
      %354 = vmatpush2.bf16.msra.mxu0 0
      %355 = vmatprep.subr.bf16.mxu0 0
      %356 = vmatpush2.bf16.msra.mxu0 0
      %357 = vmatprep.mubr.bf16.mxu0 0
      %358 = vmatmul.mubr.bf16.gmra.mxu0 %v261
      %v359 = vpop.f32.mrf.mxu0
      %v360 = vadd.f32 0.0, %v359
      %v361 = vpop.f32.mrf.mxu0
      %v362 = vpop.f32.mrf.mxu0
      %v363 = vadd.f32 0.0, %v362
      %v364 = vpop.f32.mrf.mxu0
      %365 = vmatprep.mubr.bf16.mxu0 0
      %366 = vmatmul.mubr.bf16.gmra.mxu0 %v262
      %v367 = vpop.f32.mrf.mxu0
      %v368 = vadd.f32 0.0, %v367
      %v369 = vpop.f32.mrf.mxu0
      %v370 = vpop.f32.mrf.mxu0
      %v371 = vadd.f32 0.0, %v370
      %v372 = vpop.f32.mrf.mxu0
      %373 = vmatprep.mubr.bf16.mxu0 0
      %374 = vmatmul.mubr.bf16.gmra.mxu0 %v263
      %v375 = vpop.f32.mrf.mxu0
      %v376 = vadd.f32 0.0, %v375
      %v377 = vpop.f32.mrf.mxu0
      %v378 = vpop.f32.mrf.mxu0
      %v379 = vadd.f32 0.0, %v378
      %v380 = vpop.f32.mrf.mxu0
      %381 = vmatprep.mubr.bf16.mxu0 0
      %382 = vmatmul.mubr.bf16.gmra.mxu0 %v264
      %v383 = vpop.f32.mrf.mxu0
      %v384 = vadd.f32 0.0, %v383
      %v385 = vpop.f32.mrf.mxu0
      %v386 = vpop.f32.mrf.mxu0
      %v387 = vadd.f32 0.0, %v386
      %v388 = vpop.f32.mrf.mxu0
      %389 = vmatprep.mubr.bf16.mxu0 0
      %390 = vmatmul.mubr.bf16.gmra.mxu0 %v265
      %v391 = vpop.f32.mrf.mxu0
      %v392 = vadd.f32 0.0, %v391
      %v393 = vpop.f32.mrf.mxu0
      %v394 = vpop.f32.mrf.mxu0
      %v395 = vadd.f32 0.0, %v394
      %v396 = vpop.f32.mrf.mxu0
      %397 = vmatprep.mubr.bf16.mxu0 0
      %398 = vmatmul.mubr.bf16.gmra.mxu0 %v266
      %v399 = vpop.f32.mrf.mxu0
      %v400 = vadd.f32 0.0, %v399
      %v401 = vpop.f32.mrf.mxu0
      %v402 = vpop.f32.mrf.mxu0
      %v403 = vadd.f32 0.0, %v402
      %v404 = vpop.f32.mrf.mxu0
      %405 = vmatprep.mubr.bf16.mxu0 0
      %406 = vmatmul.mubr.bf16.gmra.mxu0 %v267
      %v407 = vpop.f32.mrf.mxu0
      %v408 = vadd.f32 0.0, %v407
      %v409 = vpop.f32.mrf.mxu0
      %v410 = vpop.f32.mrf.mxu0
      %v411 = vadd.f32 0.0, %v410
      %v412 = vpop.f32.mrf.mxu0
      %413 = vmatprep.mubr.bf16.mxu0 0
      %414 = vmatmul.mubr.bf16.gmra.mxu0 %v268
      %v415 = vpop.f32.mrf.mxu0
      %v416 = vadd.f32 0.0, %v415
      %v417 = vpop.f32.mrf.mxu0
      %v418 = vpop.f32.mrf.mxu0
      %v419 = vadd.f32 0.0, %v418
      %v420 = vpop.f32.mrf.mxu0
      %421 = vdwg.mxu0
      %v422 = vmax.f32 %v360, %v392
      %v423 = vmax.f32 %v363, %v395
      %v424 = vmax.f32 %v368, %v400
      %v425 = vmax.f32 %v371, %v403
      %v426 = vmax.f32 %v376, %v408
      %v427 = vmax.f32 %v379, %v411
      %v428 = vmax.f32 %v384, %v416
      %v429 = vmax.f32 %v387, %v419
      %v430 = vmax.f32 %v422, %v423
      %v431 = vmax.f32 %v424, %v425
      %v432 = vmax.f32 %v426, %v427
      %v433 = vmax.f32 %v428, %v429
      %v435 = vrot.slane %v430, 1
      %v437 = vmax.f32 %v430, %v435
      %v439 = vrot.slane %v431, 1
      %v441 = vmax.f32 %v431, %v439
      %v443 = vrot.slane %v432, 1
      %v445 = vmax.f32 %v432, %v443
      %v447 = vrot.slane %v433, 1
      %v449 = vmax.f32 %v433, %v447
      %v451 = vrot.slane %v437, 2
      %452 = vrot.lane.b32.xlu0 %v451, 8
      %v453 = vpop.permute.xlu0 %452
      %v455 = vrot.slane %v437, 4
      %456 = vrot.lane.b32.xlu0 %v455, 16
      %v457 = vpop.permute.xlu0 %456
      %v459 = vrot.slane %v437, 6
      %460 = vrot.lane.b32.xlu0 %v459, 24
      %v461 = vpop.permute.xlu0 %460
      %464 = vrot.lane.b32.xlu0 %v441, 32
      %v465 = vpop.permute.xlu0 %464
      %v467 = vrot.slane %v441, 2
      %468 = vrot.lane.b32.xlu0 %v467, 40
      %v469 = vpop.permute.xlu0 %468
      %v471 = vrot.slane %v441, 4
      %472 = vrot.lane.b32.xlu0 %v471, 48
      %v473 = vpop.permute.xlu0 %472
      %v475 = vrot.slane %v441, 6
      %476 = vrot.lane.b32.xlu0 %v475, 56
      %v477 = vpop.permute.xlu0 %476
      %480 = vrot.lane.b32.xlu0 %v445, 64
      %v481 = vpop.permute.xlu0 %480
      %v483 = vrot.slane %v445, 2
      %484 = vrot.lane.b32.xlu0 %v483, 72
      %v485 = vpop.permute.xlu0 %484
      %v487 = vrot.slane %v445, 4
      %488 = vrot.lane.b32.xlu0 %v487, 80
      %v489 = vpop.permute.xlu0 %488
      %v491 = vrot.slane %v445, 6
      %492 = vrot.lane.b32.xlu0 %v491, 88
      %v493 = vpop.permute.xlu0 %492
      %496 = vrot.lane.b32.xlu0 %v449, 96
      %v497 = vpop.permute.xlu0 %496
      %v499 = vrot.slane %v449, 2
      %500 = vrot.lane.b32.xlu0 %v499, 104
      %v501 = vpop.permute.xlu0 %500
      %v503 = vrot.slane %v449, 4
      %504 = vrot.lane.b32.xlu0 %v503, 112
      %v505 = vpop.permute.xlu0 %504
      %v507 = vrot.slane %v449, 6
      %508 = vrot.lane.b32.xlu0 %v507, 120
      %v509 = vpop.permute.xlu0 %508
      %vm511 = vcmask 64512
      %v512 = vsel %vm511, %v437, %v453
      %vm513 = vcmask 130048
      %v514 = vsel %vm513, %v512, %v457
      %vm515 = vcmask 195584
      %v516 = vsel %vm515, %v514, %v461
      %vm517 = vcmask 261120
      %v518 = vsel %vm517, %v516, %v465
      %vm519 = vcmask 326656
      %v520 = vsel %vm519, %v518, %v469
      %vm521 = vcmask 392192
      %v522 = vsel %vm521, %v520, %v473
      %vm523 = vcmask 457728
      %v524 = vsel %vm523, %v522, %v477
      %vm525 = vcmask 523264
      %v526 = vsel %vm525, %v524, %v481
      %vm527 = vcmask 588800
      %v528 = vsel %vm527, %v526, %v485
      %vm529 = vcmask 654336
      %v530 = vsel %vm529, %v528, %v489
      %vm531 = vcmask 719872
      %v532 = vsel %vm531, %v530, %v493
      %vm533 = vcmask 785408
      %v534 = vsel %vm533, %v532, %v497
      %vm535 = vcmask 850944
      %v536 = vsel %vm535, %v534, %v501
      %vm537 = vcmask 916480
      %v538 = vsel %vm537, %v536, %v505
      %vm539 = vcmask 982016
      %v540 = vsel %vm539, %v538, %v509
      %v541 = vld [vmem:[%s191 + $0x40] sm:$0xf]
      %v542 = vld [vmem:[%s191 + $0x44] sm:$0xf]
      %v543 = vld [vmem:[%s191 + $0x48] sm:$0xf]
      %v544 = vld [vmem:[%s191 + $0x4c] sm:$0xf]
      %v545 = vld [vmem:[%s191 + $0x50] sm:$0xf]
      %v546 = vld [vmem:[%s191 + $0x54] sm:$0xf]
      %v547 = vld [vmem:[%s191 + $0x58] sm:$0xf]
      %v548 = vld [vmem:[%s191 + $0x5c] sm:$0xf]
      %v549 = vld [vmem:[%s191 + $0x60] sm:$0xf]
      %v550 = vld [vmem:[%s191 + $0x64] sm:$0xf]
      %v551 = vld [vmem:[%s191 + $0x68] sm:$0xf]
      %v552 = vld [vmem:[%s191 + $0x6c] sm:$0xf]
      %v553 = vld [vmem:[%s191 + $0x70] sm:$0xf]
      %v554 = vld [vmem:[%s191 + $0x74] sm:$0xf]
      %v555 = vld [vmem:[%s191 + $0x78] sm:$0xf]
      %v556 = vld [vmem:[%s191 + $0x7c] sm:$0xf]
      %v573 = vunpack.c.l.b16 %v541
      %v574 = vunpack.c.l.b16 %v542
      %v575 = vunpack.c.l.b16 %v543
      %v576 = vunpack.c.l.b16 %v544
      %v577 = vunpack.c.l.b16 %v545
      %v578 = vunpack.c.l.b16 %v546
      %v579 = vunpack.c.l.b16 %v547
      %v580 = vunpack.c.l.b16 %v548
      %v581 = vunpack.c.l.b16 %v549
      %v582 = vunpack.c.l.b16 %v550
      %v583 = vunpack.c.l.b16 %v551
      %v584 = vunpack.c.l.b16 %v552
      %v585 = vunpack.c.l.b16 %v553
      %v586 = vunpack.c.l.b16 %v554
      %v587 = vunpack.c.l.b16 %v555
      %v588 = vunpack.c.l.b16 %v556
      %v589 = vpack.c.b16 %v574, %v573
      %v590 = vpack.c.b16 %v576, %v575
      %v591 = vpack.c.b16 %v578, %v577
      %v592 = vpack.c.b16 %v580, %v579
      %v593 = vpack.c.b16 %v582, %v581
      %v594 = vpack.c.b16 %v584, %v583
      %v595 = vpack.c.b16 %v586, %v585
      %v596 = vpack.c.b16 %v588, %v587
      %605 = vmatprep.subr.bf16.mxu0 0
      %606 = vmatpush1.bf16.msra.mxu0 %v316
      %607 = vmatprep.subr.bf16.mxu0 0
      %608 = vmatpush1.bf16.msra.mxu0 %v315
      %609 = vmatprep.subr.bf16.mxu0 0
      %610 = vmatpush1.bf16.msra.mxu0 %v314
      %611 = vmatprep.subr.bf16.mxu0 0
      %612 = vmatpush1.bf16.msra.mxu0 %v313
      %613 = vmatprep.subr.bf16.mxu0 0
      %614 = vmatpush1.bf16.msra.mxu0 %v312
      %615 = vmatprep.subr.bf16.mxu0 0
      %616 = vmatpush1.bf16.msra.mxu0 %v311
      %617 = vmatprep.subr.bf16.mxu0 0
      %618 = vmatpush1.bf16.msra.mxu0 %v310
      %619 = vmatprep.subr.bf16.mxu0 0
      %620 = vmatpush1.bf16.msra.mxu0 %v309
      %621 = vmatprep.subr.bf16.mxu0 0
      %622 = vmatpush2.bf16.msra.mxu0 0
      %623 = vmatprep.subr.bf16.mxu0 0
      %624 = vmatpush2.bf16.msra.mxu0 0
      %625 = vmatprep.subr.bf16.mxu0 0
      %626 = vmatpush2.bf16.msra.mxu0 0
      %627 = vmatprep.subr.bf16.mxu0 0
      %628 = vmatpush2.bf16.msra.mxu0 0
      %629 = vmatprep.subr.bf16.mxu0 0
      %630 = vmatpush2.bf16.msra.mxu0 0
      %631 = vmatprep.subr.bf16.mxu0 0
      %632 = vmatpush2.bf16.msra.mxu0 0
      %633 = vmatprep.subr.bf16.mxu0 0
      %634 = vmatpush2.bf16.msra.mxu0 0
      %635 = vmatprep.subr.bf16.mxu0 0
      %636 = vmatpush2.bf16.msra.mxu0 0
      %637 = vmatprep.mubr.bf16.mxu0 0
      %638 = vmatmul.mubr.bf16.gmra.mxu0 %v589
      %v639 = vpop.f32.mrf.mxu0
      %v640 = vadd.f32 0.0, %v639
      %v641 = vpop.f32.mrf.mxu0
      %v642 = vpop.f32.mrf.mxu0
      %v643 = vadd.f32 0.0, %v642
      %v644 = vpop.f32.mrf.mxu0
      %645 = vmatprep.mubr.bf16.mxu0 0
      %646 = vmatmul.mubr.bf16.gmra.mxu0 %v590
      %v647 = vpop.f32.mrf.mxu0
      %v648 = vadd.f32 0.0, %v647
      %v649 = vpop.f32.mrf.mxu0
      %v650 = vpop.f32.mrf.mxu0
      %v651 = vadd.f32 0.0, %v650
      %v652 = vpop.f32.mrf.mxu0
      %653 = vmatprep.mubr.bf16.mxu0 0
      %654 = vmatmul.mubr.bf16.gmra.mxu0 %v591
      %v655 = vpop.f32.mrf.mxu0
      %v656 = vadd.f32 0.0, %v655
      %v657 = vpop.f32.mrf.mxu0
      %v658 = vpop.f32.mrf.mxu0
      %v659 = vadd.f32 0.0, %v658
      %v660 = vpop.f32.mrf.mxu0
      %661 = vmatprep.mubr.bf16.mxu0 0
      %662 = vmatmul.mubr.bf16.gmra.mxu0 %v592
      %v663 = vpop.f32.mrf.mxu0
      %v664 = vadd.f32 0.0, %v663
      %v665 = vpop.f32.mrf.mxu0
      %v666 = vpop.f32.mrf.mxu0
      %v667 = vadd.f32 0.0, %v666
      %v668 = vpop.f32.mrf.mxu0
      %669 = vmatprep.mubr.bf16.mxu0 0
      %670 = vmatmul.mubr.bf16.gmra.mxu0 %v593
      %v671 = vpop.f32.mrf.mxu0
      %v672 = vadd.f32 0.0, %v671
      %v673 = vpop.f32.mrf.mxu0
      %v674 = vpop.f32.mrf.mxu0
      %v675 = vadd.f32 0.0, %v674
      %v676 = vpop.f32.mrf.mxu0
      %677 = vmatprep.mubr.bf16.mxu0 0
      %678 = vmatmul.mubr.bf16.gmra.mxu0 %v594
      %v679 = vpop.f32.mrf.mxu0
      %v680 = vadd.f32 0.0, %v679
      %v681 = vpop.f32.mrf.mxu0
      %v682 = vpop.f32.mrf.mxu0
      %v683 = vadd.f32 0.0, %v682
      %v684 = vpop.f32.mrf.mxu0
      %685 = vmatprep.mubr.bf16.mxu0 0
      %686 = vmatmul.mubr.bf16.gmra.mxu0 %v595
      %v687 = vpop.f32.mrf.mxu0
      %v688 = vadd.f32 0.0, %v687
      %v689 = vpop.f32.mrf.mxu0
      %v690 = vpop.f32.mrf.mxu0
      %v691 = vadd.f32 0.0, %v690
      %v692 = vpop.f32.mrf.mxu0
      %693 = vmatprep.mubr.bf16.mxu0 0
      %694 = vmatmul.mubr.bf16.gmra.mxu0 %v596
      %v695 = vpop.f32.mrf.mxu0
      %v696 = vadd.f32 0.0, %v695
      %v697 = vpop.f32.mrf.mxu0
      %v698 = vpop.f32.mrf.mxu0
      %v699 = vadd.f32 0.0, %v698
      %v700 = vpop.f32.mrf.mxu0
      %701 = vdwg.mxu0
      %v702 = vmax.f32 %v640, %v672
      %v703 = vmax.f32 %v643, %v675
      %v704 = vmax.f32 %v648, %v680
      %v705 = vmax.f32 %v651, %v683
      %v706 = vmax.f32 %v656, %v688
      %v707 = vmax.f32 %v659, %v691
      %v708 = vmax.f32 %v664, %v696
      %v709 = vmax.f32 %v667, %v699
      %v710 = vmax.f32 %v702, %v703
      %v711 = vmax.f32 %v704, %v705
      %v712 = vmax.f32 %v706, %v707
      %v713 = vmax.f32 %v708, %v709
      %v715 = vrot.slane %v710, 1
      %v717 = vmax.f32 %v710, %v715
      %v719 = vrot.slane %v711, 1
      %v721 = vmax.f32 %v711, %v719
      %v723 = vrot.slane %v712, 1
      %v725 = vmax.f32 %v712, %v723
      %v727 = vrot.slane %v713, 1
      %v729 = vmax.f32 %v713, %v727
      %v731 = vrot.slane %v717, 2
      %732 = vrot.lane.b32.xlu0 %v731, 8
      %v733 = vpop.permute.xlu0 %732
      %v735 = vrot.slane %v717, 4
      %736 = vrot.lane.b32.xlu0 %v735, 16
      %v737 = vpop.permute.xlu0 %736
      %v739 = vrot.slane %v717, 6
      %740 = vrot.lane.b32.xlu0 %v739, 24
      %v741 = vpop.permute.xlu0 %740
      %744 = vrot.lane.b32.xlu0 %v721, 32
      %v745 = vpop.permute.xlu0 %744
      %v747 = vrot.slane %v721, 2
      %748 = vrot.lane.b32.xlu0 %v747, 40
      %v749 = vpop.permute.xlu0 %748
      %v751 = vrot.slane %v721, 4
      %752 = vrot.lane.b32.xlu0 %v751, 48
      %v753 = vpop.permute.xlu0 %752
      %v755 = vrot.slane %v721, 6
      %756 = vrot.lane.b32.xlu0 %v755, 56
      %v757 = vpop.permute.xlu0 %756
      %760 = vrot.lane.b32.xlu0 %v725, 64
      %v761 = vpop.permute.xlu0 %760
      %v763 = vrot.slane %v725, 2
      %764 = vrot.lane.b32.xlu0 %v763, 72
      %v765 = vpop.permute.xlu0 %764
      %v767 = vrot.slane %v725, 4
      %768 = vrot.lane.b32.xlu0 %v767, 80
      %v769 = vpop.permute.xlu0 %768
      %v771 = vrot.slane %v725, 6
      %772 = vrot.lane.b32.xlu0 %v771, 88
      %v773 = vpop.permute.xlu0 %772
      %776 = vrot.lane.b32.xlu0 %v729, 96
      %v777 = vpop.permute.xlu0 %776
      %v779 = vrot.slane %v729, 2
      %780 = vrot.lane.b32.xlu0 %v779, 104
      %v781 = vpop.permute.xlu0 %780
      %v783 = vrot.slane %v729, 4
      %784 = vrot.lane.b32.xlu0 %v783, 112
      %v785 = vpop.permute.xlu0 %784
      %v787 = vrot.slane %v729, 6
      %788 = vrot.lane.b32.xlu0 %v787, 120
      %v789 = vpop.permute.xlu0 %788
      %v791 = vsel %vm511, %v717, %v733
      %v792 = vsel %vm513, %v791, %v737
      %v793 = vsel %vm515, %v792, %v741
      %v794 = vsel %vm517, %v793, %v745
      %v795 = vsel %vm519, %v794, %v749
      %v796 = vsel %vm521, %v795, %v753
      %v797 = vsel %vm523, %v796, %v757
      %v798 = vsel %vm525, %v797, %v761
      %v799 = vsel %vm527, %v798, %v765
      %v800 = vsel %vm529, %v799, %v769
      %v801 = vsel %vm531, %v800, %v773
      %v802 = vsel %vm533, %v801, %v777
      %v803 = vsel %vm535, %v802, %v781
      %v804 = vsel %vm537, %v803, %v785
      %v805 = vsel %vm539, %v804, %v789
      %v806 = vld [vmem:[%s191 + $0x80] sm:$0xf]
      %v807 = vld [vmem:[%s191 + $0x84] sm:$0xf]
      %v808 = vld [vmem:[%s191 + $0x88] sm:$0xf]
      %v809 = vld [vmem:[%s191 + $0x8c] sm:$0xf]
      %v810 = vld [vmem:[%s191 + $0x90] sm:$0xf]
      %v811 = vld [vmem:[%s191 + $0x94] sm:$0xf]
      %v812 = vld [vmem:[%s191 + $0x98] sm:$0xf]
      %v813 = vld [vmem:[%s191 + $0x9c] sm:$0xf]
      %v814 = vld [vmem:[%s191 + $0xa0] sm:$0xf]
      %v815 = vld [vmem:[%s191 + $0xa4] sm:$0xf]
      %v816 = vld [vmem:[%s191 + $0xa8] sm:$0xf]
      %v817 = vld [vmem:[%s191 + $0xac] sm:$0xf]
      %v818 = vld [vmem:[%s191 + $0xb0] sm:$0xf]
      %v819 = vld [vmem:[%s191 + $0xb4] sm:$0xf]
      %v820 = vld [vmem:[%s191 + $0xb8] sm:$0xf]
      %v821 = vld [vmem:[%s191 + $0xbc] sm:$0xf]
      %v838 = vunpack.c.l.b16 %v806
      %v839 = vunpack.c.l.b16 %v807
      %v840 = vunpack.c.l.b16 %v808
      %v841 = vunpack.c.l.b16 %v809
      %v842 = vunpack.c.l.b16 %v810
      %v843 = vunpack.c.l.b16 %v811
      %v844 = vunpack.c.l.b16 %v812
      %v845 = vunpack.c.l.b16 %v813
      %v846 = vunpack.c.l.b16 %v814
      %v847 = vunpack.c.l.b16 %v815
      %v848 = vunpack.c.l.b16 %v816
      %v849 = vunpack.c.l.b16 %v817
      %v850 = vunpack.c.l.b16 %v818
      %v851 = vunpack.c.l.b16 %v819
      %v852 = vunpack.c.l.b16 %v820
      %v853 = vunpack.c.l.b16 %v821
      %v854 = vpack.c.b16 %v839, %v838
      %v855 = vpack.c.b16 %v841, %v840
      %v856 = vpack.c.b16 %v843, %v842
      %v857 = vpack.c.b16 %v845, %v844
      %v858 = vpack.c.b16 %v847, %v846
      %v859 = vpack.c.b16 %v849, %v848
      %v860 = vpack.c.b16 %v851, %v850
      %v861 = vpack.c.b16 %v853, %v852
      %870 = vmatprep.subr.bf16.mxu0 0
      %871 = vmatpush1.bf16.msra.mxu0 %v316
      %872 = vmatprep.subr.bf16.mxu0 0
      %873 = vmatpush1.bf16.msra.mxu0 %v315
      %874 = vmatprep.subr.bf16.mxu0 0
      %875 = vmatpush1.bf16.msra.mxu0 %v314
      %876 = vmatprep.subr.bf16.mxu0 0
      %877 = vmatpush1.bf16.msra.mxu0 %v313
      %878 = vmatprep.subr.bf16.mxu0 0
      %879 = vmatpush1.bf16.msra.mxu0 %v312
      %880 = vmatprep.subr.bf16.mxu0 0
      %881 = vmatpush1.bf16.msra.mxu0 %v311
      %882 = vmatprep.subr.bf16.mxu0 0
      %883 = vmatpush1.bf16.msra.mxu0 %v310
      %884 = vmatprep.subr.bf16.mxu0 0
      %885 = vmatpush1.bf16.msra.mxu0 %v309
      %886 = vmatprep.subr.bf16.mxu0 0
      %887 = vmatpush2.bf16.msra.mxu0 0
      %888 = vmatprep.subr.bf16.mxu0 0
      %889 = vmatpush2.bf16.msra.mxu0 0
      %890 = vmatprep.subr.bf16.mxu0 0
      %891 = vmatpush2.bf16.msra.mxu0 0
      %892 = vmatprep.subr.bf16.mxu0 0
      %893 = vmatpush2.bf16.msra.mxu0 0
      %894 = vmatprep.subr.bf16.mxu0 0
      %895 = vmatpush2.bf16.msra.mxu0 0
      %896 = vmatprep.subr.bf16.mxu0 0
      %897 = vmatpush2.bf16.msra.mxu0 0
      %898 = vmatprep.subr.bf16.mxu0 0
      %899 = vmatpush2.bf16.msra.mxu0 0
      %900 = vmatprep.subr.bf16.mxu0 0
      %901 = vmatpush2.bf16.msra.mxu0 0
      %902 = vmatprep.mubr.bf16.mxu0 0
      %903 = vmatmul.mubr.bf16.gmra.mxu0 %v854
      %v904 = vpop.f32.mrf.mxu0
      %v905 = vadd.f32 0.0, %v904
      %v906 = vpop.f32.mrf.mxu0
      %v907 = vpop.f32.mrf.mxu0
      %v908 = vadd.f32 0.0, %v907
      %v909 = vpop.f32.mrf.mxu0
      %910 = vmatprep.mubr.bf16.mxu0 0
      %911 = vmatmul.mubr.bf16.gmra.mxu0 %v855
      %v912 = vpop.f32.mrf.mxu0
      %v913 = vadd.f32 0.0, %v912
      %v914 = vpop.f32.mrf.mxu0
      %v915 = vpop.f32.mrf.mxu0
      %v916 = vadd.f32 0.0, %v915
      %v917 = vpop.f32.mrf.mxu0
      %918 = vmatprep.mubr.bf16.mxu0 0
      %919 = vmatmul.mubr.bf16.gmra.mxu0 %v856
      %v920 = vpop.f32.mrf.mxu0
      %v921 = vadd.f32 0.0, %v920
      %v922 = vpop.f32.mrf.mxu0
      %v923 = vpop.f32.mrf.mxu0
      %v924 = vadd.f32 0.0, %v923
      %v925 = vpop.f32.mrf.mxu0
      %926 = vmatprep.mubr.bf16.mxu0 0
      %927 = vmatmul.mubr.bf16.gmra.mxu0 %v857
      %v928 = vpop.f32.mrf.mxu0
      %v929 = vadd.f32 0.0, %v928
      %v930 = vpop.f32.mrf.mxu0
      %v931 = vpop.f32.mrf.mxu0
      %v932 = vadd.f32 0.0, %v931
      %v933 = vpop.f32.mrf.mxu0
      %934 = vmatprep.mubr.bf16.mxu0 0
      %935 = vmatmul.mubr.bf16.gmra.mxu0 %v858
      %v936 = vpop.f32.mrf.mxu0
      %v937 = vadd.f32 0.0, %v936
      %v938 = vpop.f32.mrf.mxu0
      %v939 = vpop.f32.mrf.mxu0
      %v940 = vadd.f32 0.0, %v939
      %v941 = vpop.f32.mrf.mxu0
      %942 = vmatprep.mubr.bf16.mxu0 0
      %943 = vmatmul.mubr.bf16.gmra.mxu0 %v859
      %v944 = vpop.f32.mrf.mxu0
      %v945 = vadd.f32 0.0, %v944
      %v946 = vpop.f32.mrf.mxu0
      %v947 = vpop.f32.mrf.mxu0
      %v948 = vadd.f32 0.0, %v947
      %v949 = vpop.f32.mrf.mxu0
      %950 = vmatprep.mubr.bf16.mxu0 0
      %951 = vmatmul.mubr.bf16.gmra.mxu0 %v860
      %v952 = vpop.f32.mrf.mxu0
      %v953 = vadd.f32 0.0, %v952
      %v954 = vpop.f32.mrf.mxu0
      %v955 = vpop.f32.mrf.mxu0
      %v956 = vadd.f32 0.0, %v955
      %v957 = vpop.f32.mrf.mxu0
      %958 = vmatprep.mubr.bf16.mxu0 0
      %959 = vmatmul.mubr.bf16.gmra.mxu0 %v861
      %v960 = vpop.f32.mrf.mxu0
      %v961 = vadd.f32 0.0, %v960
      %v962 = vpop.f32.mrf.mxu0
      %v963 = vpop.f32.mrf.mxu0
      %v964 = vadd.f32 0.0, %v963
      %v965 = vpop.f32.mrf.mxu0
      %966 = vdwg.mxu0
      %v967 = vmax.f32 %v905, %v937
      %v968 = vmax.f32 %v908, %v940
      %v969 = vmax.f32 %v913, %v945
      %v970 = vmax.f32 %v916, %v948
      %v971 = vmax.f32 %v921, %v953
      %v972 = vmax.f32 %v924, %v956
      %v973 = vmax.f32 %v929, %v961
      %v974 = vmax.f32 %v932, %v964
      %v975 = vmax.f32 %v967, %v968
      %v976 = vmax.f32 %v969, %v970
      %v977 = vmax.f32 %v971, %v972
      %v978 = vmax.f32 %v973, %v974
      %v980 = vrot.slane %v975, 1
      %v982 = vmax.f32 %v975, %v980
      %v984 = vrot.slane %v976, 1
      %v986 = vmax.f32 %v976, %v984
      %v988 = vrot.slane %v977, 1
      %v990 = vmax.f32 %v977, %v988
      %v992 = vrot.slane %v978, 1
      %v994 = vmax.f32 %v978, %v992
      %v996 = vrot.slane %v982, 2
      %997 = vrot.lane.b32.xlu0 %v996, 8
      %v998 = vpop.permute.xlu0 %997
      %v1000 = vrot.slane %v982, 4
      %1001 = vrot.lane.b32.xlu0 %v1000, 16
      %v1002 = vpop.permute.xlu0 %1001
      %v1004 = vrot.slane %v982, 6
      %1005 = vrot.lane.b32.xlu0 %v1004, 24
      %v1006 = vpop.permute.xlu0 %1005
      %1009 = vrot.lane.b32.xlu0 %v986, 32
      %v1010 = vpop.permute.xlu0 %1009
      %v1012 = vrot.slane %v986, 2
      %1013 = vrot.lane.b32.xlu0 %v1012, 40
      %v1014 = vpop.permute.xlu0 %1013
      %v1016 = vrot.slane %v986, 4
      %1017 = vrot.lane.b32.xlu0 %v1016, 48
      %v1018 = vpop.permute.xlu0 %1017
      %v1020 = vrot.slane %v986, 6
      %1021 = vrot.lane.b32.xlu0 %v1020, 56
      %v1022 = vpop.permute.xlu0 %1021
      %1025 = vrot.lane.b32.xlu0 %v990, 64
      %v1026 = vpop.permute.xlu0 %1025
      %v1028 = vrot.slane %v990, 2
      %1029 = vrot.lane.b32.xlu0 %v1028, 72
      %v1030 = vpop.permute.xlu0 %1029
      %v1032 = vrot.slane %v990, 4
      %1033 = vrot.lane.b32.xlu0 %v1032, 80
      %v1034 = vpop.permute.xlu0 %1033
      %v1036 = vrot.slane %v990, 6
      %1037 = vrot.lane.b32.xlu0 %v1036, 88
      %v1038 = vpop.permute.xlu0 %1037
      %1041 = vrot.lane.b32.xlu0 %v994, 96
      %v1042 = vpop.permute.xlu0 %1041
      %v1044 = vrot.slane %v994, 2
      %1045 = vrot.lane.b32.xlu0 %v1044, 104
      %v1046 = vpop.permute.xlu0 %1045
      %v1048 = vrot.slane %v994, 4
      %1049 = vrot.lane.b32.xlu0 %v1048, 112
      %v1050 = vpop.permute.xlu0 %1049
      %v1052 = vrot.slane %v994, 6
      %1053 = vrot.lane.b32.xlu0 %v1052, 120
      %v1054 = vpop.permute.xlu0 %1053
      %v1056 = vsel %vm511, %v982, %v998
      %v1057 = vsel %vm513, %v1056, %v1002
      %v1058 = vsel %vm515, %v1057, %v1006
      %v1059 = vsel %vm517, %v1058, %v1010
      %v1060 = vsel %vm519, %v1059, %v1014
      %v1061 = vsel %vm521, %v1060, %v1018
      %v1062 = vsel %vm523, %v1061, %v1022
      %v1063 = vsel %vm525, %v1062, %v1026
      %v1064 = vsel %vm527, %v1063, %v1030
      %v1065 = vsel %vm529, %v1064, %v1034
      %v1066 = vsel %vm531, %v1065, %v1038
      %v1067 = vsel %vm533, %v1066, %v1042
      %v1068 = vsel %vm535, %v1067, %v1046
      %v1069 = vsel %vm537, %v1068, %v1050
      %v1070 = vsel %vm539, %v1069, %v1054
      %v1071 = vld [vmem:[%s191 + $0xc0] sm:$0xf]
      %v1072 = vld [vmem:[%s191 + $0xc4] sm:$0xf]
      %v1073 = vld [vmem:[%s191 + $0xc8] sm:$0xf]
      %v1074 = vld [vmem:[%s191 + $0xcc] sm:$0xf]
      %v1075 = vld [vmem:[%s191 + $0xd0] sm:$0xf]
      %v1076 = vld [vmem:[%s191 + $0xd4] sm:$0xf]
      %v1077 = vld [vmem:[%s191 + $0xd8] sm:$0xf]
      %v1078 = vld [vmem:[%s191 + $0xdc] sm:$0xf]
      %v1079 = vld [vmem:[%s191 + $0xe0] sm:$0xf]
      %v1080 = vld [vmem:[%s191 + $0xe4] sm:$0xf]
      %v1081 = vld [vmem:[%s191 + $0xe8] sm:$0xf]
      %v1082 = vld [vmem:[%s191 + $0xec] sm:$0xf]
      %v1083 = vld [vmem:[%s191 + $0xf0] sm:$0xf]
      %v1084 = vld [vmem:[%s191 + $0xf4] sm:$0xf]
      %v1085 = vld [vmem:[%s191 + $0xf8] sm:$0xf]
      %v1086 = vld [vmem:[%s191 + $0xfc] sm:$0xf]
      %v1103 = vunpack.c.l.b16 %v1071
      %v1104 = vunpack.c.l.b16 %v1072
      %v1105 = vunpack.c.l.b16 %v1073
      %v1106 = vunpack.c.l.b16 %v1074
      %v1107 = vunpack.c.l.b16 %v1075
      %v1108 = vunpack.c.l.b16 %v1076
      %v1109 = vunpack.c.l.b16 %v1077
      %v1110 = vunpack.c.l.b16 %v1078
      %v1111 = vunpack.c.l.b16 %v1079
      %v1112 = vunpack.c.l.b16 %v1080
      %v1113 = vunpack.c.l.b16 %v1081
      %v1114 = vunpack.c.l.b16 %v1082
      %v1115 = vunpack.c.l.b16 %v1083
      %v1116 = vunpack.c.l.b16 %v1084
      %v1117 = vunpack.c.l.b16 %v1085
      %v1118 = vunpack.c.l.b16 %v1086
      %v1119 = vpack.c.b16 %v1104, %v1103
      %v1120 = vpack.c.b16 %v1106, %v1105
      %v1121 = vpack.c.b16 %v1108, %v1107
      %v1122 = vpack.c.b16 %v1110, %v1109
      %v1123 = vpack.c.b16 %v1112, %v1111
      %v1124 = vpack.c.b16 %v1114, %v1113
      %v1125 = vpack.c.b16 %v1116, %v1115
      %v1126 = vpack.c.b16 %v1118, %v1117
      %1135 = vmatprep.subr.bf16.mxu0 0
      %1136 = vmatpush1.bf16.msra.mxu0 %v316
      %1137 = vmatprep.subr.bf16.mxu0 0
      %1138 = vmatpush1.bf16.msra.mxu0 %v315
      %1139 = vmatprep.subr.bf16.mxu0 0
      %1140 = vmatpush1.bf16.msra.mxu0 %v314
      %1141 = vmatprep.subr.bf16.mxu0 0
      %1142 = vmatpush1.bf16.msra.mxu0 %v313
      %1143 = vmatprep.subr.bf16.mxu0 0
      %1144 = vmatpush1.bf16.msra.mxu0 %v312
      %1145 = vmatprep.subr.bf16.mxu0 0
      %1146 = vmatpush1.bf16.msra.mxu0 %v311
      %1147 = vmatprep.subr.bf16.mxu0 0
      %1148 = vmatpush1.bf16.msra.mxu0 %v310
      %1149 = vmatprep.subr.bf16.mxu0 0
      %1150 = vmatpush1.bf16.msra.mxu0 %v309
      %1151 = vmatprep.subr.bf16.mxu0 0
      %1152 = vmatpush2.bf16.msra.mxu0 0
      %1153 = vmatprep.subr.bf16.mxu0 0
      %1154 = vmatpush2.bf16.msra.mxu0 0
      %1155 = vmatprep.subr.bf16.mxu0 0
      %1156 = vmatpush2.bf16.msra.mxu0 0
      %1157 = vmatprep.subr.bf16.mxu0 0
      %1158 = vmatpush2.bf16.msra.mxu0 0
      %1159 = vmatprep.subr.bf16.mxu0 0
      %1160 = vmatpush2.bf16.msra.mxu0 0
      %1161 = vmatprep.subr.bf16.mxu0 0
      %1162 = vmatpush2.bf16.msra.mxu0 0
      %1163 = vmatprep.subr.bf16.mxu0 0
      %1164 = vmatpush2.bf16.msra.mxu0 0
      %1165 = vmatprep.subr.bf16.mxu0 0
      %1166 = vmatpush2.bf16.msra.mxu0 0
      %1167 = vmatprep.mubr.bf16.mxu0 0
      %1168 = vmatmul.mubr.bf16.gmra.mxu0 %v1119
      %v1169 = vpop.f32.mrf.mxu0
      %v1170 = vadd.f32 0.0, %v1169
      %v1171 = vpop.f32.mrf.mxu0
      %v1172 = vpop.f32.mrf.mxu0
      %v1173 = vadd.f32 0.0, %v1172
      %v1174 = vpop.f32.mrf.mxu0
      %1175 = vmatprep.mubr.bf16.mxu0 0
      %1176 = vmatmul.mubr.bf16.gmra.mxu0 %v1120
      %v1177 = vpop.f32.mrf.mxu0
      %v1178 = vadd.f32 0.0, %v1177
      %v1179 = vpop.f32.mrf.mxu0
      %v1180 = vpop.f32.mrf.mxu0
      %v1181 = vadd.f32 0.0, %v1180
      %v1182 = vpop.f32.mrf.mxu0
      %1183 = vmatprep.mubr.bf16.mxu0 0
      %1184 = vmatmul.mubr.bf16.gmra.mxu0 %v1121
      %v1185 = vpop.f32.mrf.mxu0
      %v1186 = vadd.f32 0.0, %v1185
      %v1187 = vpop.f32.mrf.mxu0
      %v1188 = vpop.f32.mrf.mxu0
      %v1189 = vadd.f32 0.0, %v1188
      %v1190 = vpop.f32.mrf.mxu0
      %1191 = vmatprep.mubr.bf16.mxu0 0
      %1192 = vmatmul.mubr.bf16.gmra.mxu0 %v1122
      %v1193 = vpop.f32.mrf.mxu0
      %v1194 = vadd.f32 0.0, %v1193
      %v1195 = vpop.f32.mrf.mxu0
      %v1196 = vpop.f32.mrf.mxu0
      %v1197 = vadd.f32 0.0, %v1196
      %v1198 = vpop.f32.mrf.mxu0
      %1199 = vmatprep.mubr.bf16.mxu0 0
      %1200 = vmatmul.mubr.bf16.gmra.mxu0 %v1123
      %v1201 = vpop.f32.mrf.mxu0
      %v1202 = vadd.f32 0.0, %v1201
      %v1203 = vpop.f32.mrf.mxu0
      %v1204 = vpop.f32.mrf.mxu0
      %v1205 = vadd.f32 0.0, %v1204
      %v1206 = vpop.f32.mrf.mxu0
      %1207 = vmatprep.mubr.bf16.mxu0 0
      %1208 = vmatmul.mubr.bf16.gmra.mxu0 %v1124
      %v1209 = vpop.f32.mrf.mxu0
      %v1210 = vadd.f32 0.0, %v1209
      %v1211 = vpop.f32.mrf.mxu0
      %v1212 = vpop.f32.mrf.mxu0
      %v1213 = vadd.f32 0.0, %v1212
      %v1214 = vpop.f32.mrf.mxu0
      %1215 = vmatprep.mubr.bf16.mxu0 0
      %1216 = vmatmul.mubr.bf16.gmra.mxu0 %v1125
      %v1217 = vpop.f32.mrf.mxu0
      %v1218 = vadd.f32 0.0, %v1217
      %v1219 = vpop.f32.mrf.mxu0
      %v1220 = vpop.f32.mrf.mxu0
      %v1221 = vadd.f32 0.0, %v1220
      %v1222 = vpop.f32.mrf.mxu0
      %1223 = vmatprep.mubr.bf16.mxu0 0
      %1224 = vmatmul.mubr.bf16.gmra.mxu0 %v1126
      %v1225 = vpop.f32.mrf.mxu0
      %v1226 = vadd.f32 0.0, %v1225
      %v1227 = vpop.f32.mrf.mxu0
      %v1228 = vpop.f32.mrf.mxu0
      %v1229 = vadd.f32 0.0, %v1228
      %v1230 = vpop.f32.mrf.mxu0
      %1231 = vdwg.mxu0
      %v1232 = vmax.f32 %v1170, %v1202
      %v1233 = vmax.f32 %v1173, %v1205
      %v1234 = vmax.f32 %v1178, %v1210
      %v1235 = vmax.f32 %v1181, %v1213
      %v1236 = vmax.f32 %v1186, %v1218
      %v1237 = vmax.f32 %v1189, %v1221
      %v1238 = vmax.f32 %v1194, %v1226
      %v1239 = vmax.f32 %v1197, %v1229
      %v1240 = vmax.f32 %v1232, %v1233
      %v1241 = vmax.f32 %v1234, %v1235
      %v1242 = vmax.f32 %v1236, %v1237
      %v1243 = vmax.f32 %v1238, %v1239
      %v1245 = vrot.slane %v1240, 1
      %v1247 = vmax.f32 %v1240, %v1245
      %v1249 = vrot.slane %v1241, 1
      %v1251 = vmax.f32 %v1241, %v1249
      %v1253 = vrot.slane %v1242, 1
      %v1255 = vmax.f32 %v1242, %v1253
      %v1257 = vrot.slane %v1243, 1
      %v1259 = vmax.f32 %v1243, %v1257
      %v1261 = vrot.slane %v1247, 2
      %1262 = vrot.lane.b32.xlu0 %v1261, 8
      %v1263 = vpop.permute.xlu0 %1262
      %v1265 = vrot.slane %v1247, 4
      %1266 = vrot.lane.b32.xlu0 %v1265, 16
      %v1267 = vpop.permute.xlu0 %1266
      %v1269 = vrot.slane %v1247, 6
      %1270 = vrot.lane.b32.xlu0 %v1269, 24
      %v1271 = vpop.permute.xlu0 %1270
      %1274 = vrot.lane.b32.xlu0 %v1251, 32
      %v1275 = vpop.permute.xlu0 %1274
      %v1277 = vrot.slane %v1251, 2
      %1278 = vrot.lane.b32.xlu0 %v1277, 40
      %v1279 = vpop.permute.xlu0 %1278
      %v1281 = vrot.slane %v1251, 4
      %1282 = vrot.lane.b32.xlu0 %v1281, 48
      %v1283 = vpop.permute.xlu0 %1282
      %v1285 = vrot.slane %v1251, 6
      %1286 = vrot.lane.b32.xlu0 %v1285, 56
      %v1287 = vpop.permute.xlu0 %1286
      %1290 = vrot.lane.b32.xlu0 %v1255, 64
      %v1291 = vpop.permute.xlu0 %1290
      %v1293 = vrot.slane %v1255, 2
      %1294 = vrot.lane.b32.xlu0 %v1293, 72
      %v1295 = vpop.permute.xlu0 %1294
      %v1297 = vrot.slane %v1255, 4
      %1298 = vrot.lane.b32.xlu0 %v1297, 80
      %v1299 = vpop.permute.xlu0 %1298
      %v1301 = vrot.slane %v1255, 6
      %1302 = vrot.lane.b32.xlu0 %v1301, 88
      %v1303 = vpop.permute.xlu0 %1302
      %1306 = vrot.lane.b32.xlu0 %v1259, 96
      %v1307 = vpop.permute.xlu0 %1306
      %v1309 = vrot.slane %v1259, 2
      %1310 = vrot.lane.b32.xlu0 %v1309, 104
      %v1311 = vpop.permute.xlu0 %1310
      %v1313 = vrot.slane %v1259, 4
      %1314 = vrot.lane.b32.xlu0 %v1313, 112
      %v1315 = vpop.permute.xlu0 %1314
      %v1317 = vrot.slane %v1259, 6
      %1318 = vrot.lane.b32.xlu0 %v1317, 120
      %v1319 = vpop.permute.xlu0 %1318
      %v1321 = vsel %vm511, %v1247, %v1263
      %v1322 = vsel %vm513, %v1321, %v1267
      %v1323 = vsel %vm515, %v1322, %v1271
      %v1324 = vsel %vm517, %v1323, %v1275
      %v1325 = vsel %vm519, %v1324, %v1279
      %v1326 = vsel %vm521, %v1325, %v1283
      %v1327 = vsel %vm523, %v1326, %v1287
      %v1328 = vsel %vm525, %v1327, %v1291
      %v1329 = vsel %vm527, %v1328, %v1295
      %v1330 = vsel %vm529, %v1329, %v1299
      %v1331 = vsel %vm531, %v1330, %v1303
      %v1332 = vsel %vm533, %v1331, %v1307
      %v1333 = vsel %vm535, %v1332, %v1311
      %v1334 = vsel %vm537, %v1333, %v1315
      %v1335 = vsel %vm539, %v1334, %v1319
      %v1337 = vrot.slane %v805, 7
      %v1340 = vrot.slane %v1070, 6
      %v1343 = vrot.slane %v1335, 5
      %vm1345 = vcmask 1040384
      %v1346 = vsel %vm1345, %v540, %v1337
      %vm1347 = vcmask 1041408
      %v1348 = vsel %vm1347, %v1346, %v1340
      %vm1349 = vcmask 1042432
      %v1350 = vsel %vm1349, %v1348, %v1343
      %v1351 = vld [vmem:[%s2] sm:$0x1]
      %v1353 = vlaneseq
      %v1354 = vshrl.u32 %v1353, 7
      %v1355 = vsub.s32 0, %v1354
      %v1356 = vrot.slane %v1351, %v1355
      %v1358 = vmul.f32 %v1350, %v1356
      %v1359 = vld [vmem:[%s3] sm:$0x1]
      %v1361 = vlaneseq
      %v1362 = vshrl.u32 %v1361, 7
      %v1363 = vsub.s32 0, %v1362
      %v1364 = vrot.slane %v1359, %v1363
      %v1366 = vadd.f32 %v1358, %v1364
      %vm1367 = vcmp.ge.f32.partialorder %v1366, 0.0
      %v1368 = vmul.f32 %v1366, 0.01
      %v1369 = vsel %vm1367, %v1366, %v1368
      %1370 = vst [vmem:[%s195] sm:$0xf] %v1369
      %p1371 = scmp.lt.s32.totalorder %s15, 1
      %s1372 = scalar_select %p1371, %s15, 1
      %s1373 = smul.addr %s1372, 4
      %s1374 = scalar_lea.vmem %s4, %s1373
      // Predicated region
      $region37: #{conv_layer_forward.1} parent=35 // pred_check
        %p1375 = pneg %p122
      $region38: #{conv_layer_forward.1} parent=35 // pred_check_branch
        %1377 = sbr.rel (%p1375) target = $region40
      $region39: #{conv_layer_forward.1} parent=35 // pred_region
        _
      $region40: #{conv_layer_forward.1} parent=35 // pred_fallthru
        _
    $region36: #{conv_layer_forward.1} parent=5 // pred_fallthru
      _
    %p1378 = scmp.le.s32.totalorder 2, %s10
    // Predicated region
    $region41: #{conv_layer_forward.1} parent=5 // pred_check
      %p1379 = pneg %p1378
    $region42: #{conv_layer_forward.1} parent=5 // pred_check_branch
      %1381 = sbr.rel (%p1379) target = $region44
    $region43: #{conv_layer_forward.1} parent=5 // pred_region
      %s1382 = ssub.s32 %s10, 2
      // Predicated region
      $region45: #{conv_layer_forward.1} parent=43 // pred_check
        %p1383 = pneg %p128
      $region46: #{conv_layer_forward.1} parent=43 // pred_check_branch
        %1385 = sbr.rel (%p1383) target = $region48
      $region47: #{conv_layer_forward.1} parent=43 // pred_region
        %p1386 = scmp.lt.s32.totalorder %s16, 1
        %s1387 = scalar_select %p1386, %s16, 1
        %s1388 = smul.addr %s1387, 4
        %s1389 = scalar_lea.vmem %s4, %s1388
      $region48: #{conv_layer_forward.1} parent=43 // pred_fallthru
        _
    $region44: #{conv_layer_forward.1} parent=5 // pred_fallthru
      _
  $region6: #{conv_layer_forward.1} parent=0 // loop_footer
    %s14 = sadd.s32 1, %s10
  $region7: #{conv_layer_forward.1} parent=0 // loop_footer_branch
    %9 = sbr.rel target = $region3
  $region8: #{conv_layer_forward.1} parent=0 // loop_exit
    _

</llo_original>
